<compile_context>
chip_gen: v6e
topology: v6e:2x2x1
jax: 0.10.0
libtpu: 0.0.40
codegen_flags: <defaults>
</compile_context>

<pallas_src>
import functools

import jax
import jax.numpy as jnp
from jax import lax
from jax.experimental import pallas as pl
from jax.experimental.pallas import tpu as pltpu


_NEG_BIG = -1e30       # "minus infinity" for masked (padded) similarity columns
_MAX_TILE = 256        # per-half row/col tile; one grid step covers a (2T, 2T)
                       # sim block.  256 fits comfortably in v7x's 32 MiB scoped
                       # VMEM; v5e/v6e (128 MiB) could go 512.
_VMEM_LIMIT = 32 * 1024 * 1024


def _round_up(x, m):
    return ((x + m - 1) // m) * m


# -----------------------------------------------------------------------------
# NT-Xent loss kernel (tiled, online log-sum-exp)
# -----------------------------------------------------------------------------
def _ntxent_kernel(zi_q_ref, zj_q_ref, zi_k_ref, zj_k_ref, out_ref,
                   q1n_sc, q2n_sc, m1_sc, l1_sc, m2_sc, l2_sc,
                   *, temp_exp, half_n, tile, masked, mm_dtype):
    """One grid step: row tile `qi` (both halves) vs. column tile `ki` (both halves).

    Maintains a per-row online log-sum-exp over all columns j (diagonal included
    for now and removed at finalization), then writes

        loss_row = log(sum_{j != row} exp(sim[row, j])) - sim[row, positive(row)]

    for the 2*tile rows owned by this row tile (cross-entropy with label 0 over
    [positive, negatives] is shift-invariant, so this matches the reference).
    """
    ki = pl.program_id(1)

    def l2_normalize(ref):
        x = ref[...].astype(jnp.float32)
        ss = jnp.sum(x * x, axis=1, keepdims=True)
        # == x / max(||x||_2, 1e-12) (F.normalize), rsqrt runs on the EUP slot.
        return x * lax.rsqrt(jnp.maximum(ss, 1e-24))

    @pl.when(ki == 0)
    def _init():
        m1_sc[...] = jnp.full_like(m1_sc, -jnp.inf)
        m2_sc[...] = jnp.full_like(m2_sc, -jnp.inf)
        l1_sc[...] = jnp.zeros_like(l1_sc)
        l2_sc[...] = jnp.zeros_like(l2_sc)
        # Row-tile normalization computed once per row tile and cached in the
        # MXU operand dtype; reused for every ki step and for finalization.
        q1n_sc[...] = l2_normalize(zi_q_ref).astype(mm_dtype)
        q2n_sc[...] = l2_normalize(zj_q_ref).astype(mm_dtype)

    q1m = q1n_sc[...]                               # (T, D) rows of the z_i half
    q2m = q2n_sc[...]                               # (T, D) rows of the z_j half
    k1m = l2_normalize(zi_k_ref).astype(mm_dtype)   # (T, D) cols of the z_i half
    k2m = l2_normalize(zj_k_ref).astype(mm_dtype)   # (T, D) cols of the z_j half

    contract = (((1,), (1,)), ((), ()))      # a @ b.T without materializing b.T

    def sim(a, b):
        return temp_exp * lax.dot_general(a, b, contract,
                                          preferred_element_type=jnp.float32)

    s11 = sim(q1m, k1m)   # (T, T)  z_i rows vs z_i cols
    s12 = sim(q1m, k2m)   #         z_i rows vs z_j cols
    s21 = sim(q2m, k1m)   #         z_j rows vs z_i cols
    s22 = sim(q2m, k2m)   #         z_j rows vs z_j cols

    if masked:            # static: padded columns exist only if half_n % tile != 0
        col = lax.broadcasted_iota(jnp.int32, (1, tile), 1)
        bias = jnp.where(ki * tile + col < half_n, 0.0, _NEG_BIG)
        s11 = s11 + bias
        s12 = s12 + bias
        s21 = s21 + bias
        s22 = s22 + bias

    def rowmax(s):
        return jnp.max(s, axis=1, keepdims=True)

    def rowsumexp(s, m):
        return jnp.sum(jnp.exp(s - m), axis=1, keepdims=True)

    m1_prev, m2_prev = m1_sc[...], m2_sc[...]
    m1 = jnp.maximum(m1_prev, jnp.maximum(rowmax(s11), rowmax(s12)))
    m2 = jnp.maximum(m2_prev, jnp.maximum(rowmax(s21), rowmax(s22)))
    l1_sc[...] = (jnp.exp(m1_prev - m1) * l1_sc[...]
                  + rowsumexp(s11, m1) + rowsumexp(s12, m1))
    l2_sc[...] = (jnp.exp(m2_prev - m2) * l2_sc[...]
                  + rowsumexp(s21, m2) + rowsumexp(s22, m2))
    m1_sc[...] = m1
    m2_sc[...] = m2

    @pl.when(ki == pl.num_programs(1) - 1)
    def _finalize():
        q1f = q1n_sc[...].astype(jnp.float32)
        q2f = q2n_sc[...].astype(jnp.float32)
        # Positive-pair logit: direct row-wise dot (same value for row i and
        # row i + half_n) -- no (N, N) positive mask.  Computed from the same
        # (possibly bf16) operands the MXU consumed, so it is consistent with
        # the positive term already present in the running denominator.
        pos = temp_exp * jnp.sum(q1f * q2f, axis=1, keepdims=True)        # (T, 1)
        # Remove the self-similarity (diagonal) term from the running
        # denominator.
        d1 = temp_exp * jnp.sum(q1f * q1f, axis=1, keepdims=True)
        d2 = temp_exp * jnp.sum(q2f * q2f, axis=1, keepdims=True)
        l1 = jnp.maximum(l1_sc[...] - jnp.exp(d1 - m1_sc[...]), 1e-30)
        l2 = jnp.maximum(l2_sc[...] - jnp.exp(d2 - m2_sc[...]), 1e-30)
        out_ref[0, :, :] = m1_sc[...] + jnp.log(l1) - pos
        out_ref[1, :, :] = m2_sc[...] + jnp.log(l2) - pos


def ntxent_loss(z_i, z_j, temperature, *, matmul_dtype=jnp.bfloat16,
                max_tile=_MAX_TILE):
    """NTXentLoss.forward.

    The module's parameter _temperature_log is deterministically initialized to
    log(1/temperature), so temperature_exp == 1/temperature: a trace-time
    constant folded straight into the kernel (no SMEM operand)."""
    assert z_i.shape == z_j.shape
    half_n, d = z_i.shape
    n = 2 * half_n
    temp_exp = 1.0 / float(temperature)

    d_pad = _round_up(d, 128)                    # zero-pad feature dim (lanes/MXU)
    if half_n <= max_tile:
        tile, half_n_pad = half_n, half_n        # single tile per half, no masking
    else:
        tile = max_tile
        half_n_pad = _round_up(half_n, tile)
    masked = half_n_pad != half_n
    num_tiles = half_n_pad // tile

    def prep(z):
        z = z.astype(jnp.float32)
        if half_n_pad != half_n or d_pad != d:
            z = jnp.pad(z, ((0, half_n_pad - half_n), (0, d_pad - d)))
        return z

    zi, zj = prep(z_i), prep(z_j)

    row_spec = pl.BlockSpec((tile, d_pad), lambda qi, ki: (qi, 0))
    col_spec = pl.BlockSpec((tile, d_pad), lambda qi, ki: (ki, 0))

    kernel = functools.partial(
        _ntxent_kernel, temp_exp=temp_exp, half_n=half_n, tile=tile,
        masked=masked, mm_dtype=matmul_dtype)

    n_pad = 2 * half_n_pad
    cost = pl.CostEstimate(
        flops=int(2 * n_pad * n_pad * d_pad + 8 * n_pad * d_pad),
        transcendentals=int(n_pad * n_pad + 4 * n_pad),
        bytes_accessed=int(4 * 2 * half_n_pad * d_pad * (num_tiles + 1)
                           + 4 * n_pad),
    )

    loss_rows = pl.pallas_call(
        kernel,
        grid_spec=pltpu.PrefetchScalarGridSpec(
            num_scalar_prefetch=0,
            grid=(num_tiles, num_tiles),          # reduction (column) axis last
            in_specs=[row_spec, row_spec, col_spec, col_spec],
            out_specs=pl.BlockSpec((2, tile, 1), lambda qi, ki: (0, qi, 0)),
            scratch_shapes=[pltpu.VMEM((tile, d_pad), matmul_dtype),   # q1 normalized
                            pltpu.VMEM((tile, d_pad), matmul_dtype),   # q2 normalized
                            pltpu.VMEM((tile, 1), jnp.float32),        # m1
                            pltpu.VMEM((tile, 1), jnp.float32),        # l1
                            pltpu.VMEM((tile, 1), jnp.float32),        # m2
                            pltpu.VMEM((tile, 1), jnp.float32)],       # l2
        ),
        out_shape=jax.ShapeDtypeStruct((2, half_n_pad, 1), jnp.float32),
        compiler_params=pltpu.CompilerParams(
            dimension_semantics=("parallel", "arbitrary"),
            vmem_limit_bytes=_VMEM_LIMIT,
        ),
        cost_estimate=cost,
    )(zi, zj, zi, zj)

    # Mean over the 2*half_n real rows (padded query rows are sliced away).
    return jnp.sum(loss_rows[:, :half_n, 0]) / n


# -----------------------------------------------------------------------------
# Fused softmax + batch-wise entropy kernel for BOTH logit tensors
# (emits already-transposed probabilities, one launch instead of two)
# -----------------------------------------------------------------------------
def _softmax_entropy_kernel(l1_ref, l2_ref, p1t_ref, p2t_ref, e1_ref, e2_ref):
    def one(l_ref, pt_ref, e_ref):
        x = l_ref[...].astype(jnp.float32)                      # (B, K)
        x = x - jnp.max(x, axis=1, keepdims=True)
        e = jnp.exp(x)
        inv_denom = pl.reciprocal(jnp.sum(e, axis=1, keepdims=True), approx=True)
        probs = e * inv_denom                                   # (B, K)
        # Lane-dense (K, B) store, consumed directly by the cluster-level NT-Xent.
        pt_ref[...] = probs.T
        pavg = jnp.mean(probs, axis=0, keepdims=True)           # (1, K)
        e_ref[...] = -jnp.sum(pavg * jnp.log(pavg + 1e-10), axis=1, keepdims=True)

    one(l1_ref, p1t_ref, e1_ref)
    one(l2_ref, p2t_ref, e2_ref)


def softmax_and_entropy_t(logits_1, logits_2):
    """Row softmax of both logit tensors.

    Returns (probs_1^T, probs_2^T) with shape (K, B) plus the two batch-wise
    entropies, all from a single pallas_call."""
    b, k = logits_1.shape
    assert logits_2.shape == (b, k)
    cost = pl.CostEstimate(flops=16 * b * k,
                           transcendentals=2 * (b * k + k),
                           bytes_accessed=4 * (4 * b * k + 2))
    p1t, p2t, e1, e2 = pl.pallas_call(
        _softmax_entropy_kernel,
        grid=(1,),
        out_shape=(jax.ShapeDtypeStruct((k, b), jnp.float32),
                   jax.ShapeDtypeStruct((k, b), jnp.float32),
                   jax.ShapeDtypeStruct((1, 1), jnp.float32),
                   jax.ShapeDtypeStruct((1, 1), jnp.float32)),
        in_specs=[pl.BlockSpec((b, k), lambda i: (0, 0)),
                  pl.BlockSpec((b, k), lambda i: (0, 0))],
        out_specs=(pl.BlockSpec((k, b), lambda i: (0, 0)),
                   pl.BlockSpec((k, b), lambda i: (0, 0)),
                   pl.BlockSpec((1, 1), lambda i: (0, 0)),
                   pl.BlockSpec((1, 1), lambda i: (0, 0))),
        compiler_params=pltpu.CompilerParams(vmem_limit_bytes=_VMEM_LIMIT),
        cost_estimate=cost,
    )(logits_1.astype(jnp.float32), logits_2.astype(jnp.float32))
    return p1t, p2t, e1[0, 0], e2[0, 0]


# -----------------------------------------------------------------------------
# ContrastiveClusteringLoss forward
# -----------------------------------------------------------------------------
def contrastive_clustering_loss(embeddings_1, embeddings_2, logits_1, logits_2,
                                *, clusters_count,
                                temperature_embeddings=0.5,
                                temperature_clusters=1.0,
                                regularization_strength=1.0):
    # instance-level NT-Xent over embeddings (bf16 MXU path, f32 accumulation)
    loss_embeddings = ntxent_loss(embeddings_1, embeddings_2,
                                  temperature_embeddings,
                                  matmul_dtype=jnp.bfloat16)

    # cluster probabilities (already transposed to (K, B)) + batch-wise entropies
    probs_1_t, probs_2_t, ent_1, ent_2 = softmax_and_entropy_t(logits_1, logits_2)

    # cluster-level NT-Xent over (K, B) probabilities; tiny problem -> exact f32
    loss_clusters = ntxent_loss(probs_1_t, probs_2_t, temperature_clusters,
                                matmul_dtype=jnp.float32)

    batch_wise_clusters_entropy = ent_1 + ent_2
    uniform_clusters_entropy = 2.0 * jnp.log(jnp.float32(clusters_count))
    regularization = regularization_strength * (uniform_clusters_entropy
                                                - batch_wise_clusters_entropy)
    loss_clusters_regularized = loss_clusters + regularization
    loss_total = loss_embeddings + loss_clusters_regularized
    return (loss_embeddings, loss_clusters, batch_wise_clusters_entropy,
            loss_total)


# -----------------------------------------------------------------------------
# Pure-JAX f32 reference (direct port of the PyTorch module) for validation
# -----------------------------------------------------------------------------
def _ntxent_reference(z_i, z_j, temperature):
    half_n = z_i.shape[0]
    n = 2 * half_n
    z = jnp.concatenate([z_i, z_j], axis=0).astype(jnp.float32)
    norm = jnp.sqrt(jnp.sum(z * z, axis=1, keepdims=True))
    z = z / jnp.maximum(norm, 1e-12)
    sim = (z @ z.T) * (1.0 / temperature)
    sim = sim - jnp.max(sim, axis=1, keepdims=True)
    idx = jnp.arange(n)
    pos_col = jnp.where(idx < half_n, idx + half_n, idx - half_n)
    pos = sim[idx, pos_col]
    neg_mask = (idx[None, :] != idx[:, None]) & (idx[None, :] != pos_col[:, None])
    denom = jnp.exp(pos) + jnp.sum(jnp.where(neg_mask, jnp.exp(sim), 0.0), axis=1)
    return jnp.mean(jnp.log(denom) - pos)


def _reference_forward(e1, e2, l1, l2, clusters_count, t_emb, t_clu, reg):
    def bw_entropy(p):
        pavg = jnp.mean(p, axis=0)
        return -jnp.sum(pavg * jnp.log(pavg + 1e-10))
    loss_e = _ntxent_reference(e1, e2, t_emb)
    p1 = jax.nn.softmax(l1, axis=1)
    p2 = jax.nn.softmax(l2, axis=1)
    loss_c = _ntxent_reference(p1.T, p2.T, t_clu)
    bwe = bw_entropy(p1) + bw_entropy(p2)
    total = loss_e + loss_c + reg * (2.0 * jnp.log(jnp.float32(clusters_count))
                                     - bwe)
    return loss_e, loss_c, bwe, total


if __name__ == "__main__":
    batch_size = 8
    embed_dim = 32
    clusters_count = 4

    key = jax.random.PRNGKey(0)
    k1, k2, k3, k4 = jax.random.split(key, 4)
    embeddings_1 = jax.random.normal(k1, (batch_size, embed_dim), jnp.float32)
    embeddings_2 = jax.random.normal(k2, (batch_size, embed_dim), jnp.float32)
    logits_1 = jax.random.normal(k3, (batch_size, clusters_count), jnp.float32)
    logits_2 = jax.random.normal(k4, (batch_size, clusters_count), jnp.float32)

    fwd = jax.jit(functools.partial(
        contrastive_clustering_loss,
        clusters_count=clusters_count,
        temperature_embeddings=0.5,
        temperature_clusters=1.0,
        regularization_strength=1.0))

    outs = jax.block_until_ready(fwd(embeddings_1, embeddings_2,
                                     logits_1, logits_2))
    loss_embeddings, loss_clusters, entropy, loss_total = outs
    assert all(bool(jnp.isfinite(v)) for v in outs)

    # Loose tolerance vs. pure-f32 reference (kernel uses bf16 MXU matmuls and
    # approximate reciprocal, so ~1e-2-level drift is expected and acceptable).
    ref = _reference_forward(embeddings_1, embeddings_2, logits_1, logits_2,
                             clusters_count, 0.5, 1.0, 1.0)
    for got, want in zip(outs, ref):
        assert jnp.allclose(got, want, rtol=8e-2, atol=8e-2), (got, want)

    print("KERNEL_OK")
</pallas_src>

<mosaic_0001>
module attributes {stable_mosaic.version = 11 : i64} {
  func.func @_ntxent_kernel(%arg0: i32, %arg1: i32, %arg2: memref<8x128xf32, #tpu.memory_space<vmem>>, %arg3: memref<8x128xf32, #tpu.memory_space<vmem>>, %arg4: memref<8x128xf32, #tpu.memory_space<vmem>>, %arg5: memref<8x128xf32, #tpu.memory_space<vmem>>, %arg6: memref<2x8x1xf32, #tpu.memory_space<vmem>>, %arg7: memref<8x128xbf16, #tpu.memory_space<vmem>>, %arg8: memref<8x128xbf16, #tpu.memory_space<vmem>>, %arg9: memref<8x1xf32, #tpu.memory_space<vmem>>, %arg10: memref<8x1xf32, #tpu.memory_space<vmem>>, %arg11: memref<8x1xf32, #tpu.memory_space<vmem>>, %arg12: memref<8x1xf32, #tpu.memory_space<vmem>>) attributes {dimension_semantics = [#tpu.dimension_semantics<parallel>, #tpu.dimension_semantics<arbitrary>], iteration_bounds = array<i64: 1, 1>, scalar_prefetch = 0 : i64, scratch_operands = 6 : i64, tpu.core_type = #tpu.core_type<tc>, window_params = [{transform_indices = @transform_0, window_bounds = array<i64: 8, 128>}, {transform_indices = @transform_1, window_bounds = array<i64: 8, 128>}, {transform_indices = @transform_2, window_bounds = array<i64: 8, 128>}, {transform_indices = @transform_3, window_bounds = array<i64: 8, 128>}, {transform_indices = @transform_4, window_bounds = array<i64: 2, 8, 1>}]} {
    %c0_i32 = arith.constant 0 : i32
    %0 = arith.cmpi eq, %arg1, %c0_i32 : i32
    %1 = arith.extui %0 : i1 to i32
    %c0_i32_0 = arith.constant 0 : i32
    %2 = arith.cmpi ne, %1, %c0_i32_0 : i32
    scf.if %2 {
      %cst_45 = arith.constant 0xFF800000 : f32
      %90 = vector.broadcast %cst_45 : f32 to vector<8x1xf32>
      %c0_46 = arith.constant 0 : index
      %c0_47 = arith.constant 0 : index
      %91 = vector.load %arg9[%c0_46, %c0_47] : memref<8x1xf32, #tpu.memory_space<vmem>>, vector<8x1xf32>
      tpu.vector_store %arg9[%c0_46, %c0_47], %90 {strides = array<i32>} : memref<8x1xf32, #tpu.memory_space<vmem>>, vector<8x1xf32>,
      %cst_48 = arith.constant 0xFF800000 : f32
      %92 = vector.broadcast %cst_48 : f32 to vector<8x1xf32>
      %c0_49 = arith.constant 0 : index
      %c0_50 = arith.constant 0 : index
      %93 = vector.load %arg11[%c0_49, %c0_50] : memref<8x1xf32, #tpu.memory_space<vmem>>, vector<8x1xf32>
      tpu.vector_store %arg11[%c0_49, %c0_50], %92 {strides = array<i32>} : memref<8x1xf32, #tpu.memory_space<vmem>>, vector<8x1xf32>,
      %cst_51 = arith.constant 0.000000e+00 : f32
      %94 = vector.broadcast %cst_51 : f32 to vector<8x1xf32>
      %c0_52 = arith.constant 0 : index
      %c0_53 = arith.constant 0 : index
      %95 = vector.load %arg10[%c0_52, %c0_53] : memref<8x1xf32, #tpu.memory_space<vmem>>, vector<8x1xf32>
      tpu.vector_store %arg10[%c0_52, %c0_53], %94 {strides = array<i32>} : memref<8x1xf32, #tpu.memory_space<vmem>>, vector<8x1xf32>,
      %cst_54 = arith.constant 0.000000e+00 : f32
      %96 = vector.broadcast %cst_54 : f32 to vector<8x1xf32>
      %c0_55 = arith.constant 0 : index
      %c0_56 = arith.constant 0 : index
      %97 = vector.load %arg12[%c0_55, %c0_56] : memref<8x1xf32, #tpu.memory_space<vmem>>, vector<8x1xf32>
      tpu.vector_store %arg12[%c0_55, %c0_56], %96 {strides = array<i32>} : memref<8x1xf32, #tpu.memory_space<vmem>>, vector<8x1xf32>,
      %c0_57 = arith.constant 0 : index
      %c0_58 = arith.constant 0 : index
      %98 = vector.load %arg2[%c0_57, %c0_58] : memref<8x128xf32, #tpu.memory_space<vmem>>, vector<8x128xf32>
      %99 = arith.mulf %98, %98 : vector<8x128xf32>
      %cst_59 = arith.constant dense<0.000000e+00> : vector<8xf32>
      %100 = vector.multi_reduction <add>, %99, %cst_59 [1] : vector<8x128xf32> to vector<8xf32>
      %101 = vector.shape_cast %100 : vector<8xf32> to vector<8x1xf32>
      %cst_60 = arith.constant 1.000000e-24 : f32
      %102 = vector.broadcast %cst_60 : f32 to vector<8x1xf32>
      %103 = arith.maximumf %101, %102 : vector<8x1xf32>
      %104 = math.rsqrt %103 : vector<8x1xf32>
      %105 = vector.broadcast %104 : vector<8x1xf32> to vector<8x128xf32>
      %106 = arith.mulf %98, %105 : vector<8x128xf32>
      %107 = arith.truncf %106 : vector<8x128xf32> to vector<8x128xbf16>
      %c0_61 = arith.constant 0 : index
      %c0_62 = arith.constant 0 : index
      %108 = vector.load %arg7[%c0_61, %c0_62] : memref<8x128xbf16, #tpu.memory_space<vmem>>, vector<8x128xbf16>
      tpu.vector_store %arg7[%c0_61, %c0_62], %107 {strides = array<i32>} : memref<8x128xbf16, #tpu.memory_space<vmem>>, vector<8x128xbf16>,
      %c0_63 = arith.constant 0 : index
      %c0_64 = arith.constant 0 : index
      %109 = vector.load %arg3[%c0_63, %c0_64] : memref<8x128xf32, #tpu.memory_space<vmem>>, vector<8x128xf32>
      %110 = arith.mulf %109, %109 : vector<8x128xf32>
      %cst_65 = arith.constant dense<0.000000e+00> : vector<8xf32>
      %111 = vector.multi_reduction <add>, %110, %cst_65 [1] : vector<8x128xf32> to vector<8xf32>
      %112 = vector.shape_cast %111 : vector<8xf32> to vector<8x1xf32>
      %cst_66 = arith.constant 1.000000e-24 : f32
      %113 = vector.broadcast %cst_66 : f32 to vector<8x1xf32>
      %114 = arith.maximumf %112, %113 : vector<8x1xf32>
      %115 = math.rsqrt %114 : vector<8x1xf32>
      %116 = vector.broadcast %115 : vector<8x1xf32> to vector<8x128xf32>
      %117 = arith.mulf %109, %116 : vector<8x128xf32>
      %118 = arith.truncf %117 : vector<8x128xf32> to vector<8x128xbf16>
      %c0_67 = arith.constant 0 : index
      %c0_68 = arith.constant 0 : index
      %119 = vector.load %arg8[%c0_67, %c0_68] : memref<8x128xbf16, #tpu.memory_space<vmem>>, vector<8x128xbf16>
      tpu.vector_store %arg8[%c0_67, %c0_68], %118 {strides = array<i32>} : memref<8x128xbf16, #tpu.memory_space<vmem>>, vector<8x128xbf16>,
    } else {
    }
    %c0 = arith.constant 0 : index
    %c0_1 = arith.constant 0 : index
    %3 = vector.load %arg7[%c0, %c0_1] : memref<8x128xbf16, #tpu.memory_space<vmem>>, vector<8x128xbf16>
    %c0_2 = arith.constant 0 : index
    %c0_3 = arith.constant 0 : index
    %4 = vector.load %arg8[%c0_2, %c0_3] : memref<8x128xbf16, #tpu.memory_space<vmem>>, vector<8x128xbf16>
    %c0_4 = arith.constant 0 : index
    %c0_5 = arith.constant 0 : index
    %5 = vector.load %arg4[%c0_4, %c0_5] : memref<8x128xf32, #tpu.memory_space<vmem>>, vector<8x128xf32>
    %6 = arith.mulf %5, %5 : vector<8x128xf32>
    %cst = arith.constant dense<0.000000e+00> : vector<8xf32>
    %7 = vector.multi_reduction <add>, %6, %cst [1] : vector<8x128xf32> to vector<8xf32>
    %8 = vector.shape_cast %7 : vector<8xf32> to vector<8x1xf32>
    %cst_6 = arith.constant 1.000000e-24 : f32
    %9 = vector.broadcast %cst_6 : f32 to vector<8x1xf32>
    %10 = arith.maximumf %8, %9 : vector<8x1xf32>
    %11 = math.rsqrt %10 : vector<8x1xf32>
    %12 = vector.broadcast %11 : vector<8x1xf32> to vector<8x128xf32>
    %13 = arith.mulf %5, %12 : vector<8x128xf32>
    %14 = arith.truncf %13 : vector<8x128xf32> to vector<8x128xbf16>
    %c0_7 = arith.constant 0 : index
    %c0_8 = arith.constant 0 : index
    %15 = vector.load %arg5[%c0_7, %c0_8] : memref<8x128xf32, #tpu.memory_space<vmem>>, vector<8x128xf32>
    %16 = arith.mulf %15, %15 : vector<8x128xf32>
    %cst_9 = arith.constant dense<0.000000e+00> : vector<8xf32>
    %17 = vector.multi_reduction <add>, %16, %cst_9 [1] : vector<8x128xf32> to vector<8xf32>
    %18 = vector.shape_cast %17 : vector<8xf32> to vector<8x1xf32>
    %cst_10 = arith.constant 1.000000e-24 : f32
    %19 = vector.broadcast %cst_10 : f32 to vector<8x1xf32>
    %20 = arith.maximumf %18, %19 : vector<8x1xf32>
    %21 = math.rsqrt %20 : vector<8x1xf32>
    %22 = vector.broadcast %21 : vector<8x1xf32> to vector<8x128xf32>
    %23 = arith.mulf %15, %22 : vector<8x128xf32>
    %24 = arith.truncf %23 : vector<8x128xf32> to vector<8x128xbf16>
    %cst_11 = arith.constant dense<0.000000e+00> : vector<8x8xf32>
    %25 = tpu.matmul %3, %14, %cst_11 {dimension_numbers = #tpu.dot_dimension_numbers<[1], [1], [0], [0], [0, 0, 1, 0], [], []>} : vector<8x128xbf16>, vector<8x128xbf16>, vector<8x8xf32> -> vector<8x8xf32>
    %cst_12 = arith.constant 2.000000e+00 : f32
    %26 = vector.broadcast %cst_12 : f32 to vector<8x8xf32>
    %27 = arith.mulf %26, %25 : vector<8x8xf32>
    %cst_13 = arith.constant dense<0.000000e+00> : vector<8x8xf32>
    %28 = tpu.matmul %3, %24, %cst_13 {dimension_numbers = #tpu.dot_dimension_numbers<[1], [1], [0], [0], [0, 0, 1, 0], [], []>} : vector<8x128xbf16>, vector<8x128xbf16>, vector<8x8xf32> -> vector<8x8xf32>
    %cst_14 = arith.constant 2.000000e+00 : f32
    %29 = vector.broadcast %cst_14 : f32 to vector<8x8xf32>
    %30 = arith.mulf %29, %28 : vector<8x8xf32>
    %cst_15 = arith.constant dense<0.000000e+00> : vector<8x8xf32>
    %31 = tpu.matmul %4, %14, %cst_15 {dimension_numbers = #tpu.dot_dimension_numbers<[1], [1], [0], [0], [0, 0, 1, 0], [], []>} : vector<8x128xbf16>, vector<8x128xbf16>, vector<8x8xf32> -> vector<8x8xf32>
    %cst_16 = arith.constant 2.000000e+00 : f32
    %32 = vector.broadcast %cst_16 : f32 to vector<8x8xf32>
    %33 = arith.mulf %32, %31 : vector<8x8xf32>
    %cst_17 = arith.constant dense<0.000000e+00> : vector<8x8xf32>
    %34 = tpu.matmul %4, %24, %cst_17 {dimension_numbers = #tpu.dot_dimension_numbers<[1], [1], [0], [0], [0, 0, 1, 0], [], []>} : vector<8x128xbf16>, vector<8x128xbf16>, vector<8x8xf32> -> vector<8x8xf32>
    %cst_18 = arith.constant 2.000000e+00 : f32
    %35 = vector.broadcast %cst_18 : f32 to vector<8x8xf32>
    %36 = arith.mulf %35, %34 : vector<8x8xf32>
    %c0_19 = arith.constant 0 : index
    %c0_20 = arith.constant 0 : index
    %37 = vector.load %arg9[%c0_19, %c0_20] : memref<8x1xf32, #tpu.memory_space<vmem>>, vector<8x1xf32>
    %c0_21 = arith.constant 0 : index
    %c0_22 = arith.constant 0 : index
    %38 = vector.load %arg11[%c0_21, %c0_22] : memref<8x1xf32, #tpu.memory_space<vmem>>, vector<8x1xf32>
    %cst_23 = arith.constant dense<0xFF800000> : vector<8xf32>
    %39 = vector.multi_reduction <maximumf>, %27, %cst_23 [1] : vector<8x8xf32> to vector<8xf32>
    %40 = vector.shape_cast %39 : vector<8xf32> to vector<8x1xf32>
    %cst_24 = arith.constant dense<0xFF800000> : vector<8xf32>
    %41 = vector.multi_reduction <maximumf>, %30, %cst_24 [1] : vector<8x8xf32> to vector<8xf32>
    %42 = vector.shape_cast %41 : vector<8xf32> to vector<8x1xf32>
    %43 = arith.maximumf %40, %42 : vector<8x1xf32>
    %44 = arith.maximumf %37, %43 : vector<8x1xf32>
    %cst_25 = arith.constant dense<0xFF800000> : vector<8xf32>
    %45 = vector.multi_reduction <maximumf>, %33, %cst_25 [1] : vector<8x8xf32> to vector<8xf32>
    %46 = vector.shape_cast %45 : vector<8xf32> to vector<8x1xf32>
    %cst_26 = arith.constant dense<0xFF800000> : vector<8xf32>
    %47 = vector.multi_reduction <maximumf>, %36, %cst_26 [1] : vector<8x8xf32> to vector<8xf32>
    %48 = vector.shape_cast %47 : vector<8xf32> to vector<8x1xf32>
    %49 = arith.maximumf %46, %48 : vector<8x1xf32>
    %50 = arith.maximumf %38, %49 : vector<8x1xf32>
    %51 = arith.subf %37, %44 : vector<8x1xf32>
    %52 = math.exp %51 : vector<8x1xf32>
    %c0_27 = arith.constant 0 : index
    %c0_28 = arith.constant 0 : index
    %53 = vector.load %arg10[%c0_27, %c0_28] : memref<8x1xf32, #tpu.memory_space<vmem>>, vector<8x1xf32>
    %54 = arith.mulf %52, %53 : vector<8x1xf32>
    %55 = vector.broadcast %44 : vector<8x1xf32> to vector<8x8xf32>
    %56 = arith.subf %27, %55 : vector<8x8xf32>
    %57 = math.exp %56 : vector<8x8xf32>
    %cst_29 = arith.constant dense<0.000000e+00> : vector<8xf32>
    %58 = vector.multi_reduction <add>, %57, %cst_29 [1] : vector<8x8xf32> to vector<8xf32>
    %59 = vector.shape_cast %58 : vector<8xf32> to vector<8x1xf32>
    %60 = arith.addf %54, %59 : vector<8x1xf32>
    %61 = vector.broadcast %44 : vector<8x1xf32> to vector<8x8xf32>
    %62 = arith.subf %30, %61 : vector<8x8xf32>
    %63 = math.exp %62 : vector<8x8xf32>
    %cst_30 = arith.constant dense<0.000000e+00> : vector<8xf32>
    %64 = vector.multi_reduction <add>, %63, %cst_30 [1] : vector<8x8xf32> to vector<8xf32>
    %65 = vector.shape_cast %64 : vector<8xf32> to vector<8x1xf32>
    %66 = arith.addf %60, %65 : vector<8x1xf32>
    %c0_31 = arith.constant 0 : index
    %c0_32 = arith.constant 0 : index
    %67 = vector.load %arg10[%c0_31, %c0_32] : memref<8x1xf32, #tpu.memory_space<vmem>>, vector<8x1xf32>
    tpu.vector_store %arg10[%c0_31, %c0_32], %66 {strides = array<i32>} : memref<8x1xf32, #tpu.memory_space<vmem>>, vector<8x1xf32>,
    %68 = arith.subf %38, %50 : vector<8x1xf32>
    %69 = math.exp %68 : vector<8x1xf32>
    %c0_33 = arith.constant 0 : index
    %c0_34 = arith.constant 0 : index
    %70 = vector.load %arg12[%c0_33, %c0_34] : memref<8x1xf32, #tpu.memory_space<vmem>>, vector<8x1xf32>
    %71 = arith.mulf %69, %70 : vector<8x1xf32>
    %72 = vector.broadcast %50 : vector<8x1xf32> to vector<8x8xf32>
    %73 = arith.subf %33, %72 : vector<8x8xf32>
    %74 = math.exp %73 : vector<8x8xf32>
    %cst_35 = arith.constant dense<0.000000e+00> : vector<8xf32>
    %75 = vector.multi_reduction <add>, %74, %cst_35 [1] : vector<8x8xf32> to vector<8xf32>
    %76 = vector.shape_cast %75 : vector<8xf32> to vector<8x1xf32>
    %77 = arith.addf %71, %76 : vector<8x1xf32>
    %78 = vector.broadcast %50 : vector<8x1xf32> to vector<8x8xf32>
    %79 = arith.subf %36, %78 : vector<8x8xf32>
    %80 = math.exp %79 : vector<8x8xf32>
    %cst_36 = arith.constant dense<0.000000e+00> : vector<8xf32>
    %81 = vector.multi_reduction <add>, %80, %cst_36 [1] : vector<8x8xf32> to vector<8xf32>
    %82 = vector.shape_cast %81 : vector<8xf32> to vector<8x1xf32>
    %83 = arith.addf %77, %82 : vector<8x1xf32>
    %c0_37 = arith.constant 0 : index
    %c0_38 = arith.constant 0 : index
    %84 = vector.load %arg12[%c0_37, %c0_38] : memref<8x1xf32, #tpu.memory_space<vmem>>, vector<8x1xf32>
    tpu.vector_store %arg12[%c0_37, %c0_38], %83 {strides = array<i32>} : memref<8x1xf32, #tpu.memory_space<vmem>>, vector<8x1xf32>,
    %c0_39 = arith.constant 0 : index
    %c0_40 = arith.constant 0 : index
    %85 = vector.load %arg9[%c0_39, %c0_40] : memref<8x1xf32, #tpu.memory_space<vmem>>, vector<8x1xf32>
    tpu.vector_store %arg9[%c0_39, %c0_40], %44 {strides = array<i32>} : memref<8x1xf32, #tpu.memory_space<vmem>>, vector<8x1xf32>,
    %c0_41 = arith.constant 0 : index
    %c0_42 = arith.constant 0 : index
    %86 = vector.load %arg11[%c0_41, %c0_42] : memref<8x1xf32, #tpu.memory_space<vmem>>, vector<8x1xf32>
    tpu.vector_store %arg11[%c0_41, %c0_42], %50 {strides = array<i32>} : memref<8x1xf32, #tpu.memory_space<vmem>>, vector<8x1xf32>,
    %c0_i32_43 = arith.constant 0 : i32
    %87 = arith.cmpi eq, %arg1, %c0_i32_43 : i32
    %88 = arith.extui %87 : i1 to i32
    %c0_i32_44 = arith.constant 0 : i32
    %89 = arith.cmpi ne, %88, %c0_i32_44 : i32
    scf.if %89 {
      %c0_45 = arith.constant 0 : index
      %c0_46 = arith.constant 0 : index
      %90 = vector.load %arg7[%c0_45, %c0_46] : memref<8x128xbf16, #tpu.memory_space<vmem>>, vector<8x128xbf16>
      %91 = arith.extf %90 : vector<8x128xbf16> to vector<8x128xf32>
      %c0_47 = arith.constant 0 : index
      %c0_48 = arith.constant 0 : index
      %92 = vector.load %arg8[%c0_47, %c0_48] : memref<8x128xbf16, #tpu.memory_space<vmem>>, vector<8x128xbf16>
      %93 = arith.extf %92 : vector<8x128xbf16> to vector<8x128xf32>
      %94 = arith.mulf %91, %93 : vector<8x128xf32>
      %cst_49 = arith.constant dense<0.000000e+00> : vector<8xf32>
      %95 = vector.multi_reduction <add>, %94, %cst_49 [1] : vector<8x128xf32> to vector<8xf32>
      %96 = vector.shape_cast %95 : vector<8xf32> to vector<8x1xf32>
      %cst_50 = arith.constant 2.000000e+00 : f32
      %97 = vector.broadcast %cst_50 : f32 to vector<8x1xf32>
      %98 = arith.mulf %97, %96 : vector<8x1xf32>
      %99 = arith.mulf %91, %91 : vector<8x128xf32>
      %cst_51 = arith.constant dense<0.000000e+00> : vector<8xf32>
      %100 = vector.multi_reduction <add>, %99, %cst_51 [1] : vector<8x128xf32> to vector<8xf32>
      %101 = vector.shape_cast %100 : vector<8xf32> to vector<8x1xf32>
      %cst_52 = arith.constant 2.000000e+00 : f32
      %102 = vector.broadcast %cst_52 : f32 to vector<8x1xf32>
      %103 = arith.mulf %102, %101 : vector<8x1xf32>
      %104 = arith.mulf %93, %93 : vector<8x128xf32>
      %cst_53 = arith.constant dense<0.000000e+00> : vector<8xf32>
      %105 = vector.multi_reduction <add>, %104, %cst_53 [1] : vector<8x128xf32> to vector<8xf32>
      %106 = vector.shape_cast %105 : vector<8xf32> to vector<8x1xf32>
      %cst_54 = arith.constant 2.000000e+00 : f32
      %107 = vector.broadcast %cst_54 : f32 to vector<8x1xf32>
      %108 = arith.mulf %107, %106 : vector<8x1xf32>
      %c0_55 = arith.constant 0 : index
      %c0_56 = arith.constant 0 : index
      %109 = vector.load %arg10[%c0_55, %c0_56] : memref<8x1xf32, #tpu.memory_space<vmem>>, vector<8x1xf32>
      %c0_57 = arith.constant 0 : index
      %c0_58 = arith.constant 0 : index
      %110 = vector.load %arg9[%c0_57, %c0_58] : memref<8x1xf32, #tpu.memory_space<vmem>>, vector<8x1xf32>
      %111 = arith.subf %103, %110 : vector<8x1xf32>
      %112 = math.exp %111 : vector<8x1xf32>
      %113 = arith.subf %109, %112 : vector<8x1xf32>
      %cst_59 = arith.constant 1.000000e-30 : f32
      %114 = vector.broadcast %cst_59 : f32 to vector<8x1xf32>
      %115 = arith.maximumf %113, %114 : vector<8x1xf32>
      %c0_60 = arith.constant 0 : index
      %c0_61 = arith.constant 0 : index
      %116 = vector.load %arg12[%c0_60, %c0_61] : memref<8x1xf32, #tpu.memory_space<vmem>>, vector<8x1xf32>
      %c0_62 = arith.constant 0 : index
      %c0_63 = arith.constant 0 : index
      %117 = vector.load %arg11[%c0_62, %c0_63] : memref<8x1xf32, #tpu.memory_space<vmem>>, vector<8x1xf32>
      %118 = arith.subf %108, %117 : vector<8x1xf32>
      %119 = math.exp %118 : vector<8x1xf32>
      %120 = arith.subf %116, %119 : vector<8x1xf32>
      %cst_64 = arith.constant 1.000000e-30 : f32
      %121 = vector.broadcast %cst_64 : f32 to vector<8x1xf32>
      %122 = arith.maximumf %120, %121 : vector<8x1xf32>
      %c0_65 = arith.constant 0 : index
      %c0_66 = arith.constant 0 : index
      %123 = vector.load %arg9[%c0_65, %c0_66] : memref<8x1xf32, #tpu.memory_space<vmem>>, vector<8x1xf32>
      %124 = math.log %115 : vector<8x1xf32>
      %125 = arith.addf %123, %124 : vector<8x1xf32>
      %126 = arith.subf %125, %98 : vector<8x1xf32>
      %c0_67 = arith.constant 0 : index
      %c0_68 = arith.constant 0 : index
      %c0_69 = arith.constant 0 : index
      %127 = vector.load %arg6[%c0_67, %c0_68, %c0_69] : memref<2x8x1xf32, #tpu.memory_space<vmem>>, vector<1x8x1xf32>
      %128 = vector.shape_cast %127 : vector<1x8x1xf32> to vector<8x1xf32>
      %129 = vector.shape_cast %126 : vector<8x1xf32> to vector<1x8x1xf32>
      tpu.vector_store %arg6[%c0_67, %c0_68, %c0_69], %129 {strides = array<i32>} : memref<2x8x1xf32, #tpu.memory_space<vmem>>, vector<1x8x1xf32>,
      %c0_70 = arith.constant 0 : index
      %c0_71 = arith.constant 0 : index
      %130 = vector.load %arg11[%c0_70, %c0_71] : memref<8x1xf32, #tpu.memory_space<vmem>>, vector<8x1xf32>
      %131 = math.log %122 : vector<8x1xf32>
      %132 = arith.addf %130, %131 : vector<8x1xf32>
      %133 = arith.subf %132, %98 : vector<8x1xf32>
      %c1 = arith.constant 1 : index
      %c0_72 = arith.constant 0 : index
      %c0_73 = arith.constant 0 : index
      %134 = vector.load %arg6[%c1, %c0_72, %c0_73] : memref<2x8x1xf32, #tpu.memory_space<vmem>>, vector<1x8x1xf32>
      %135 = vector.shape_cast %134 : vector<1x8x1xf32> to vector<8x1xf32>
      %136 = vector.shape_cast %133 : vector<8x1xf32> to vector<1x8x1xf32>
      tpu.vector_store %arg6[%c1, %c0_72, %c0_73], %136 {strides = array<i32>} : memref<2x8x1xf32, #tpu.memory_space<vmem>>, vector<1x8x1xf32>,
    } else {
    }
    return
  }
  func.func @transform_0(%arg0: i32, %arg1: i32) -> (i32, i32) {
    %c0_i32 = arith.constant 0 : i32
    %c0_i32_0 = arith.constant 0 : i32
    return %arg0, %c0_i32 : i32, i32
  }
  func.func @transform_1(%arg0: i32, %arg1: i32) -> (i32, i32) {
    %c0_i32 = arith.constant 0 : i32
    %c0_i32_0 = arith.constant 0 : i32
    return %arg0, %c0_i32 : i32, i32
  }
  func.func @transform_2(%arg0: i32, %arg1: i32) -> (i32, i32) {
    %c0_i32 = arith.constant 0 : i32
    %c0_i32_0 = arith.constant 0 : i32
    return %arg1, %c0_i32 : i32, i32
  }
  func.func @transform_3(%arg0: i32, %arg1: i32) -> (i32, i32) {
    %c0_i32 = arith.constant 0 : i32
    %c0_i32_0 = arith.constant 0 : i32
    return %arg1, %c0_i32 : i32, i32
  }
  func.func @transform_4(%arg0: i32, %arg1: i32) -> (i32, i32, i32) {
    %c0_i32 = arith.constant 0 : i32
    %c0_i32_0 = arith.constant 0 : i32
    %c0_i32_1 = arith.constant 0 : i32
    return %c0_i32, %arg0, %c0_i32_0 : i32, i32, i32
  }
}

module attributes {stable_mosaic.version = 11 : i64} {
  func.func @_softmax_entropy_kernel(%arg0: i32, %arg1: memref<8x4xf32, #tpu.memory_space<vmem>>, %arg2: memref<8x4xf32, #tpu.memory_space<vmem>>, %arg3: memref<4x8xf32, #tpu.memory_space<vmem>>, %arg4: memref<4x8xf32, #tpu.memory_space<vmem>>, %arg5: memref<1x1xf32, #tpu.memory_space<vmem>>, %arg6: memref<1x1xf32, #tpu.memory_space<vmem>>) attributes {dimension_semantics = [#tpu.dimension_semantics<arbitrary>], iteration_bounds = array<i64: 1>, scalar_prefetch = 0 : i64, scratch_operands = 0 : i64, tpu.core_type = #tpu.core_type<tc>, window_params = [{pipeline_mode = #tpu.pipeline_mode<synchronous>, transform_indices = @transform_0, window_bounds = array<i64: 8, 4>}, {pipeline_mode = #tpu.pipeline_mode<synchronous>, transform_indices = @transform_1, window_bounds = array<i64: 8, 4>}, {pipeline_mode = #tpu.pipeline_mode<synchronous>, transform_indices = @transform_2, window_bounds = array<i64: 4, 8>}, {pipeline_mode = #tpu.pipeline_mode<synchronous>, transform_indices = @transform_3, window_bounds = array<i64: 4, 8>}, {pipeline_mode = #tpu.pipeline_mode<synchronous>, transform_indices = @transform_4, window_bounds = array<i64: 1, 1>}, {pipeline_mode = #tpu.pipeline_mode<synchronous>, transform_indices = @transform_5, window_bounds = array<i64: 1, 1>}]} {
    %c0 = arith.constant 0 : index
    %c0_0 = arith.constant 0 : index
    %0 = vector.load %arg1[%c0, %c0_0] : memref<8x4xf32, #tpu.memory_space<vmem>>, vector<8x4xf32>
    %cst = arith.constant dense<0xFF800000> : vector<8xf32>
    %1 = vector.multi_reduction <maximumf>, %0, %cst [1] : vector<8x4xf32> to vector<8xf32>
    %2 = vector.shape_cast %1 : vector<8xf32> to vector<8x1xf32>
    %3 = vector.broadcast %2 : vector<8x1xf32> to vector<8x4xf32>
    %4 = arith.subf %0, %3 : vector<8x4xf32>
    %5 = math.exp %4 : vector<8x4xf32>
    %cst_1 = arith.constant dense<0.000000e+00> : vector<8xf32>
    %6 = vector.multi_reduction <add>, %5, %cst_1 [1] : vector<8x4xf32> to vector<8xf32>
    %7 = vector.shape_cast %6 : vector<8xf32> to vector<8x1xf32>
    %8 = tpu.reciprocal %7 {approx = true} : vector<8x1xf32> -> vector<8x1xf32>
    %9 = vector.broadcast %8 : vector<8x1xf32> to vector<8x4xf32>
    %10 = arith.mulf %5, %9 : vector<8x4xf32>
    %11 = tpu.transpose %10, [1, 0] : vector<8x4xf32> -> vector<4x8xf32>
    %c0_2 = arith.constant 0 : index
    %c0_3 = arith.constant 0 : index
    %12 = vector.load %arg3[%c0_2, %c0_3] : memref<4x8xf32, #tpu.memory_space<vmem>>, vector<4x8xf32>
    tpu.vector_store %arg3[%c0_2, %c0_3], %11 {strides = array<i32>} : memref<4x8xf32, #tpu.memory_space<vmem>>, vector<4x8xf32>,
    %cst_4 = arith.constant dense<0.000000e+00> : vector<4xf32>
    %13 = vector.multi_reduction <add>, %10, %cst_4 [0] : vector<8x4xf32> to vector<4xf32>
    %14 = vector.shape_cast %13 : vector<4xf32> to vector<1x4xf32>
    %cst_5 = arith.constant 8.000000e+00 : f32
    %15 = vector.broadcast %cst_5 : f32 to vector<1x4xf32>
    %16 = arith.divf %14, %15 : vector<1x4xf32>
    %cst_6 = arith.constant 1.000000e-10 : f32
    %17 = vector.broadcast %cst_6 : f32 to vector<1x4xf32>
    %18 = arith.addf %16, %17 : vector<1x4xf32>
    %19 = math.log %18 : vector<1x4xf32>
    %20 = arith.mulf %16, %19 : vector<1x4xf32>
    %cst_7 = arith.constant dense<0.000000e+00> : vector<1xf32>
    %21 = vector.multi_reduction <add>, %20, %cst_7 [1] : vector<1x4xf32> to vector<1xf32>
    %22 = vector.shape_cast %21 : vector<1xf32> to vector<1x1xf32>
    %cst_8 = arith.constant 0.000000e+00 : f32
    %23 = vector.broadcast %cst_8 : f32 to vector<1x1xf32>
    %24 = arith.subf %23, %22 : vector<1x1xf32>
    %c0_9 = arith.constant 0 : index
    %c0_10 = arith.constant 0 : index
    %25 = vector.load %arg5[%c0_9, %c0_10] : memref<1x1xf32, #tpu.memory_space<vmem>>, vector<1x1xf32>
    tpu.vector_store %arg5[%c0_9, %c0_10], %24 {strides = array<i32>} : memref<1x1xf32, #tpu.memory_space<vmem>>, vector<1x1xf32>,
    %c0_11 = arith.constant 0 : index
    %c0_12 = arith.constant 0 : index
    %26 = vector.load %arg2[%c0_11, %c0_12] : memref<8x4xf32, #tpu.memory_space<vmem>>, vector<8x4xf32>
    %cst_13 = arith.constant dense<0xFF800000> : vector<8xf32>
    %27 = vector.multi_reduction <maximumf>, %26, %cst_13 [1] : vector<8x4xf32> to vector<8xf32>
    %28 = vector.shape_cast %27 : vector<8xf32> to vector<8x1xf32>
    %29 = vector.broadcast %28 : vector<8x1xf32> to vector<8x4xf32>
    %30 = arith.subf %26, %29 : vector<8x4xf32>
    %31 = math.exp %30 : vector<8x4xf32>
    %cst_14 = arith.constant dense<0.000000e+00> : vector<8xf32>
    %32 = vector.multi_reduction <add>, %31, %cst_14 [1] : vector<8x4xf32> to vector<8xf32>
    %33 = vector.shape_cast %32 : vector<8xf32> to vector<8x1xf32>
    %34 = tpu.reciprocal %33 {approx = true} : vector<8x1xf32> -> vector<8x1xf32>
    %35 = vector.broadcast %34 : vector<8x1xf32> to vector<8x4xf32>
    %36 = arith.mulf %31, %35 : vector<8x4xf32>
    %37 = tpu.transpose %36, [1, 0] : vector<8x4xf32> -> vector<4x8xf32>
    %c0_15 = arith.constant 0 : index
    %c0_16 = arith.constant 0 : index
    %38 = vector.load %arg4[%c0_15, %c0_16] : memref<4x8xf32, #tpu.memory_space<vmem>>, vector<4x8xf32>
    tpu.vector_store %arg4[%c0_15, %c0_16], %37 {strides = array<i32>} : memref<4x8xf32, #tpu.memory_space<vmem>>, vector<4x8xf32>,
    %cst_17 = arith.constant dense<0.000000e+00> : vector<4xf32>
    %39 = vector.multi_reduction <add>, %36, %cst_17 [0] : vector<8x4xf32> to vector<4xf32>
    %40 = vector.shape_cast %39 : vector<4xf32> to vector<1x4xf32>
    %cst_18 = arith.constant 8.000000e+00 : f32
    %41 = vector.broadcast %cst_18 : f32 to vector<1x4xf32>
    %42 = arith.divf %40, %41 : vector<1x4xf32>
    %cst_19 = arith.constant 1.000000e-10 : f32
    %43 = vector.broadcast %cst_19 : f32 to vector<1x4xf32>
    %44 = arith.addf %42, %43 : vector<1x4xf32>
    %45 = math.log %44 : vector<1x4xf32>
    %46 = arith.mulf %42, %45 : vector<1x4xf32>
    %cst_20 = arith.constant dense<0.000000e+00> : vector<1xf32>
    %47 = vector.multi_reduction <add>, %46, %cst_20 [1] : vector<1x4xf32> to vector<1xf32>
    %48 = vector.shape_cast %47 : vector<1xf32> to vector<1x1xf32>
    %cst_21 = arith.constant 0.000000e+00 : f32
    %49 = vector.broadcast %cst_21 : f32 to vector<1x1xf32>
    %50 = arith.subf %49, %48 : vector<1x1xf32>
    %c0_22 = arith.constant 0 : index
    %c0_23 = arith.constant 0 : index
    %51 = vector.load %arg6[%c0_22, %c0_23] : memref<1x1xf32, #tpu.memory_space<vmem>>, vector<1x1xf32>
    tpu.vector_store %arg6[%c0_22, %c0_23], %50 {strides = array<i32>} : memref<1x1xf32, #tpu.memory_space<vmem>>, vector<1x1xf32>,
    return
  }
  func.func @transform_0(%arg0: i32) -> (i32, i32) {
    %c0_i32 = arith.constant 0 : i32
    %c0_i32_0 = arith.constant 0 : i32
    %c0_i32_1 = arith.constant 0 : i32
    return %c0_i32, %c0_i32_0 : i32, i32
  }
  func.func @transform_1(%arg0: i32) -> (i32, i32) {
    %c0_i32 = arith.constant 0 : i32
    %c0_i32_0 = arith.constant 0 : i32
    %c0_i32_1 = arith.constant 0 : i32
    return %c0_i32, %c0_i32_0 : i32, i32
  }
  func.func @transform_2(%arg0: i32) -> (i32, i32) {
    %c0_i32 = arith.constant 0 : i32
    %c0_i32_0 = arith.constant 0 : i32
    %c0_i32_1 = arith.constant 0 : i32
    return %c0_i32, %c0_i32_0 : i32, i32
  }
  func.func @transform_3(%arg0: i32) -> (i32, i32) {
    %c0_i32 = arith.constant 0 : i32
    %c0_i32_0 = arith.constant 0 : i32
    %c0_i32_1 = arith.constant 0 : i32
    return %c0_i32, %c0_i32_0 : i32, i32
  }
  func.func @transform_4(%arg0: i32) -> (i32, i32) {
    %c0_i32 = arith.constant 0 : i32
    %c0_i32_0 = arith.constant 0 : i32
    %c0_i32_1 = arith.constant 0 : i32
    return %c0_i32, %c0_i32_0 : i32, i32
  }
  func.func @transform_5(%arg0: i32) -> (i32, i32) {
    %c0_i32 = arith.constant 0 : i32
    %c0_i32_0 = arith.constant 0 : i32
    %c0_i32_1 = arith.constant 0 : i32
    return %c0_i32, %c0_i32_0 : i32, i32
  }
}

module attributes {stable_mosaic.version = 11 : i64} {
  func.func @_ntxent_kernel(%arg0: i32, %arg1: i32, %arg2: memref<4x128xf32, #tpu.memory_space<vmem>>, %arg3: memref<4x128xf32, #tpu.memory_space<vmem>>, %arg4: memref<4x128xf32, #tpu.memory_space<vmem>>, %arg5: memref<4x128xf32, #tpu.memory_space<vmem>>, %arg6: memref<2x4x1xf32, #tpu.memory_space<vmem>>, %arg7: memref<4x128xf32, #tpu.memory_space<vmem>>, %arg8: memref<4x128xf32, #tpu.memory_space<vmem>>, %arg9: memref<4x1xf32, #tpu.memory_space<vmem>>, %arg10: memref<4x1xf32, #tpu.memory_space<vmem>>, %arg11: memref<4x1xf32, #tpu.memory_space<vmem>>, %arg12: memref<4x1xf32, #tpu.memory_space<vmem>>) attributes {dimension_semantics = [#tpu.dimension_semantics<parallel>, #tpu.dimension_semantics<arbitrary>], iteration_bounds = array<i64: 1, 1>, scalar_prefetch = 0 : i64, scratch_operands = 6 : i64, tpu.core_type = #tpu.core_type<tc>, window_params = [{transform_indices = @transform_0, window_bounds = array<i64: 4, 128>}, {transform_indices = @transform_1, window_bounds = array<i64: 4, 128>}, {transform_indices = @transform_2, window_bounds = array<i64: 4, 128>}, {transform_indices = @transform_3, window_bounds = array<i64: 4, 128>}, {transform_indices = @transform_4, window_bounds = array<i64: 2, 4, 1>}]} {
    %c0_i32 = arith.constant 0 : i32
    %0 = arith.cmpi eq, %arg1, %c0_i32 : i32
    %1 = arith.extui %0 : i1 to i32
    %c0_i32_0 = arith.constant 0 : i32
    %2 = arith.cmpi ne, %1, %c0_i32_0 : i32
    scf.if %2 {
      %cst_45 = arith.constant 0xFF800000 : f32
      %88 = vector.broadcast %cst_45 : f32 to vector<4x1xf32>
      %c0_46 = arith.constant 0 : index
      %c0_47 = arith.constant 0 : index
      %89 = vector.load %arg9[%c0_46, %c0_47] : memref<4x1xf32, #tpu.memory_space<vmem>>, vector<4x1xf32>
      tpu.vector_store %arg9[%c0_46, %c0_47], %88 {strides = array<i32>} : memref<4x1xf32, #tpu.memory_space<vmem>>, vector<4x1xf32>,
      %cst_48 = arith.constant 0xFF800000 : f32
      %90 = vector.broadcast %cst_48 : f32 to vector<4x1xf32>
      %c0_49 = arith.constant 0 : index
      %c0_50 = arith.constant 0 : index
      %91 = vector.load %arg11[%c0_49, %c0_50] : memref<4x1xf32, #tpu.memory_space<vmem>>, vector<4x1xf32>
      tpu.vector_store %arg11[%c0_49, %c0_50], %90 {strides = array<i32>} : memref<4x1xf32, #tpu.memory_space<vmem>>, vector<4x1xf32>,
      %cst_51 = arith.constant 0.000000e+00 : f32
      %92 = vector.broadcast %cst_51 : f32 to vector<4x1xf32>
      %c0_52 = arith.constant 0 : index
      %c0_53 = arith.constant 0 : index
      %93 = vector.load %arg10[%c0_52, %c0_53] : memref<4x1xf32, #tpu.memory_space<vmem>>, vector<4x1xf32>
      tpu.vector_store %arg10[%c0_52, %c0_53], %92 {strides = array<i32>} : memref<4x1xf32, #tpu.memory_space<vmem>>, vector<4x1xf32>,
      %cst_54 = arith.constant 0.000000e+00 : f32
      %94 = vector.broadcast %cst_54 : f32 to vector<4x1xf32>
      %c0_55 = arith.constant 0 : index
      %c0_56 = arith.constant 0 : index
      %95 = vector.load %arg12[%c0_55, %c0_56] : memref<4x1xf32, #tpu.memory_space<vmem>>, vector<4x1xf32>
      tpu.vector_store %arg12[%c0_55, %c0_56], %94 {strides = array<i32>} : memref<4x1xf32, #tpu.memory_space<vmem>>, vector<4x1xf32>,
      %c0_57 = arith.constant 0 : index
      %c0_58 = arith.constant 0 : index
      %96 = vector.load %arg2[%c0_57, %c0_58] : memref<4x128xf32, #tpu.memory_space<vmem>>, vector<4x128xf32>
      %97 = arith.mulf %96, %96 : vector<4x128xf32>
      %cst_59 = arith.constant dense<0.000000e+00> : vector<4xf32>
      %98 = vector.multi_reduction <add>, %97, %cst_59 [1] : vector<4x128xf32> to vector<4xf32>
      %99 = vector.shape_cast %98 : vector<4xf32> to vector<4x1xf32>
      %cst_60 = arith.constant 1.000000e-24 : f32
      %100 = vector.broadcast %cst_60 : f32 to vector<4x1xf32>
      %101 = arith.maximumf %99, %100 : vector<4x1xf32>
      %102 = math.rsqrt %101 : vector<4x1xf32>
      %103 = vector.broadcast %102 : vector<4x1xf32> to vector<4x128xf32>
      %104 = arith.mulf %96, %103 : vector<4x128xf32>
      %c0_61 = arith.constant 0 : index
      %c0_62 = arith.constant 0 : index
      %105 = vector.load %arg7[%c0_61, %c0_62] : memref<4x128xf32, #tpu.memory_space<vmem>>, vector<4x128xf32>
      tpu.vector_store %arg7[%c0_61, %c0_62], %104 {strides = array<i32>} : memref<4x128xf32, #tpu.memory_space<vmem>>, vector<4x128xf32>,
      %c0_63 = arith.constant 0 : index
      %c0_64 = arith.constant 0 : index
      %106 = vector.load %arg3[%c0_63, %c0_64] : memref<4x128xf32, #tpu.memory_space<vmem>>, vector<4x128xf32>
      %107 = arith.mulf %106, %106 : vector<4x128xf32>
      %cst_65 = arith.constant dense<0.000000e+00> : vector<4xf32>
      %108 = vector.multi_reduction <add>, %107, %cst_65 [1] : vector<4x128xf32> to vector<4xf32>
      %109 = vector.shape_cast %108 : vector<4xf32> to vector<4x1xf32>
      %cst_66 = arith.constant 1.000000e-24 : f32
      %110 = vector.broadcast %cst_66 : f32 to vector<4x1xf32>
      %111 = arith.maximumf %109, %110 : vector<4x1xf32>
      %112 = math.rsqrt %111 : vector<4x1xf32>
      %113 = vector.broadcast %112 : vector<4x1xf32> to vector<4x128xf32>
      %114 = arith.mulf %106, %113 : vector<4x128xf32>
      %c0_67 = arith.constant 0 : index
      %c0_68 = arith.constant 0 : index
      %115 = vector.load %arg8[%c0_67, %c0_68] : memref<4x128xf32, #tpu.memory_space<vmem>>, vector<4x128xf32>
      tpu.vector_store %arg8[%c0_67, %c0_68], %114 {strides = array<i32>} : memref<4x128xf32, #tpu.memory_space<vmem>>, vector<4x128xf32>,
    } else {
    }
    %c0 = arith.constant 0 : index
    %c0_1 = arith.constant 0 : index
    %3 = vector.load %arg7[%c0, %c0_1] : memref<4x128xf32, #tpu.memory_space<vmem>>, vector<4x128xf32>
    %c0_2 = arith.constant 0 : index
    %c0_3 = arith.constant 0 : index
    %4 = vector.load %arg8[%c0_2, %c0_3] : memref<4x128xf32, #tpu.memory_space<vmem>>, vector<4x128xf32>
    %c0_4 = arith.constant 0 : index
    %c0_5 = arith.constant 0 : index
    %5 = vector.load %arg4[%c0_4, %c0_5] : memref<4x128xf32, #tpu.memory_space<vmem>>, vector<4x128xf32>
    %6 = arith.mulf %5, %5 : vector<4x128xf32>
    %cst = arith.constant dense<0.000000e+00> : vector<4xf32>
    %7 = vector.multi_reduction <add>, %6, %cst [1] : vector<4x128xf32> to vector<4xf32>
    %8 = vector.shape_cast %7 : vector<4xf32> to vector<4x1xf32>
    %cst_6 = arith.constant 1.000000e-24 : f32
    %9 = vector.broadcast %cst_6 : f32 to vector<4x1xf32>
    %10 = arith.maximumf %8, %9 : vector<4x1xf32>
    %11 = math.rsqrt %10 : vector<4x1xf32>
    %12 = vector.broadcast %11 : vector<4x1xf32> to vector<4x128xf32>
    %13 = arith.mulf %5, %12 : vector<4x128xf32>
    %c0_7 = arith.constant 0 : index
    %c0_8 = arith.constant 0 : index
    %14 = vector.load %arg5[%c0_7, %c0_8] : memref<4x128xf32, #tpu.memory_space<vmem>>, vector<4x128xf32>
    %15 = arith.mulf %14, %14 : vector<4x128xf32>
    %cst_9 = arith.constant dense<0.000000e+00> : vector<4xf32>
    %16 = vector.multi_reduction <add>, %15, %cst_9 [1] : vector<4x128xf32> to vector<4xf32>
    %17 = vector.shape_cast %16 : vector<4xf32> to vector<4x1xf32>
    %cst_10 = arith.constant 1.000000e-24 : f32
    %18 = vector.broadcast %cst_10 : f32 to vector<4x1xf32>
    %19 = arith.maximumf %17, %18 : vector<4x1xf32>
    %20 = math.rsqrt %19 : vector<4x1xf32>
    %21 = vector.broadcast %20 : vector<4x1xf32> to vector<4x128xf32>
    %22 = arith.mulf %14, %21 : vector<4x128xf32>
    %cst_11 = arith.constant dense<0.000000e+00> : vector<4x4xf32>
    %23 = tpu.matmul %3, %13, %cst_11 {dimension_numbers = #tpu.dot_dimension_numbers<[1], [1], [0], [0], [0, 0, 1, 0], [], []>} : vector<4x128xf32>, vector<4x128xf32>, vector<4x4xf32> -> vector<4x4xf32>
    %cst_12 = arith.constant 1.000000e+00 : f32
    %24 = vector.broadcast %cst_12 : f32 to vector<4x4xf32>
    %25 = arith.mulf %24, %23 : vector<4x4xf32>
    %cst_13 = arith.constant dense<0.000000e+00> : vector<4x4xf32>
    %26 = tpu.matmul %3, %22, %cst_13 {dimension_numbers = #tpu.dot_dimension_numbers<[1], [1], [0], [0], [0, 0, 1, 0], [], []>} : vector<4x128xf32>, vector<4x128xf32>, vector<4x4xf32> -> vector<4x4xf32>
    %cst_14 = arith.constant 1.000000e+00 : f32
    %27 = vector.broadcast %cst_14 : f32 to vector<4x4xf32>
    %28 = arith.mulf %27, %26 : vector<4x4xf32>
    %cst_15 = arith.constant dense<0.000000e+00> : vector<4x4xf32>
    %29 = tpu.matmul %4, %13, %cst_15 {dimension_numbers = #tpu.dot_dimension_numbers<[1], [1], [0], [0], [0, 0, 1, 0], [], []>} : vector<4x128xf32>, vector<4x128xf32>, vector<4x4xf32> -> vector<4x4xf32>
    %cst_16 = arith.constant 1.000000e+00 : f32
    %30 = vector.broadcast %cst_16 : f32 to vector<4x4xf32>
    %31 = arith.mulf %30, %29 : vector<4x4xf32>
    %cst_17 = arith.constant dense<0.000000e+00> : vector<4x4xf32>
    %32 = tpu.matmul %4, %22, %cst_17 {dimension_numbers = #tpu.dot_dimension_numbers<[1], [1], [0], [0], [0, 0, 1, 0], [], []>} : vector<4x128xf32>, vector<4x128xf32>, vector<4x4xf32> -> vector<4x4xf32>
    %cst_18 = arith.constant 1.000000e+00 : f32
    %33 = vector.broadcast %cst_18 : f32 to vector<4x4xf32>
    %34 = arith.mulf %33, %32 : vector<4x4xf32>
    %c0_19 = arith.constant 0 : index
    %c0_20 = arith.constant 0 : index
    %35 = vector.load %arg9[%c0_19, %c0_20] : memref<4x1xf32, #tpu.memory_space<vmem>>, vector<4x1xf32>
    %c0_21 = arith.constant 0 : index
    %c0_22 = arith.constant 0 : index
    %36 = vector.load %arg11[%c0_21, %c0_22] : memref<4x1xf32, #tpu.memory_space<vmem>>, vector<4x1xf32>
    %cst_23 = arith.constant dense<0xFF800000> : vector<4xf32>
    %37 = vector.multi_reduction <maximumf>, %25, %cst_23 [1] : vector<4x4xf32> to vector<4xf32>
    %38 = vector.shape_cast %37 : vector<4xf32> to vector<4x1xf32>
    %cst_24 = arith.constant dense<0xFF800000> : vector<4xf32>
    %39 = vector.multi_reduction <maximumf>, %28, %cst_24 [1] : vector<4x4xf32> to vector<4xf32>
    %40 = vector.shape_cast %39 : vector<4xf32> to vector<4x1xf32>
    %41 = arith.maximumf %38, %40 : vector<4x1xf32>
    %42 = arith.maximumf %35, %41 : vector<4x1xf32>
    %cst_25 = arith.constant dense<0xFF800000> : vector<4xf32>
    %43 = vector.multi_reduction <maximumf>, %31, %cst_25 [1] : vector<4x4xf32> to vector<4xf32>
    %44 = vector.shape_cast %43 : vector<4xf32> to vector<4x1xf32>
    %cst_26 = arith.constant dense<0xFF800000> : vector<4xf32>
    %45 = vector.multi_reduction <maximumf>, %34, %cst_26 [1] : vector<4x4xf32> to vector<4xf32>
    %46 = vector.shape_cast %45 : vector<4xf32> to vector<4x1xf32>
    %47 = arith.maximumf %44, %46 : vector<4x1xf32>
    %48 = arith.maximumf %36, %47 : vector<4x1xf32>
    %49 = arith.subf %35, %42 : vector<4x1xf32>
    %50 = math.exp %49 : vector<4x1xf32>
    %c0_27 = arith.constant 0 : index
    %c0_28 = arith.constant 0 : index
    %51 = vector.load %arg10[%c0_27, %c0_28] : memref<4x1xf32, #tpu.memory_space<vmem>>, vector<4x1xf32>
    %52 = arith.mulf %50, %51 : vector<4x1xf32>
    %53 = vector.broadcast %42 : vector<4x1xf32> to vector<4x4xf32>
    %54 = arith.subf %25, %53 : vector<4x4xf32>
    %55 = math.exp %54 : vector<4x4xf32>
    %cst_29 = arith.constant dense<0.000000e+00> : vector<4xf32>
    %56 = vector.multi_reduction <add>, %55, %cst_29 [1] : vector<4x4xf32> to vector<4xf32>
    %57 = vector.shape_cast %56 : vector<4xf32> to vector<4x1xf32>
    %58 = arith.addf %52, %57 : vector<4x1xf32>
    %59 = vector.broadcast %42 : vector<4x1xf32> to vector<4x4xf32>
    %60 = arith.subf %28, %59 : vector<4x4xf32>
    %61 = math.exp %60 : vector<4x4xf32>
    %cst_30 = arith.constant dense<0.000000e+00> : vector<4xf32>
    %62 = vector.multi_reduction <add>, %61, %cst_30 [1] : vector<4x4xf32> to vector<4xf32>
    %63 = vector.shape_cast %62 : vector<4xf32> to vector<4x1xf32>
    %64 = arith.addf %58, %63 : vector<4x1xf32>
    %c0_31 = arith.constant 0 : index
    %c0_32 = arith.constant 0 : index
    %65 = vector.load %arg10[%c0_31, %c0_32] : memref<4x1xf32, #tpu.memory_space<vmem>>, vector<4x1xf32>
    tpu.vector_store %arg10[%c0_31, %c0_32], %64 {strides = array<i32>} : memref<4x1xf32, #tpu.memory_space<vmem>>, vector<4x1xf32>,
    %66 = arith.subf %36, %48 : vector<4x1xf32>
    %67 = math.exp %66 : vector<4x1xf32>
    %c0_33 = arith.constant 0 : index
    %c0_34 = arith.constant 0 : index
    %68 = vector.load %arg12[%c0_33, %c0_34] : memref<4x1xf32, #tpu.memory_space<vmem>>, vector<4x1xf32>
    %69 = arith.mulf %67, %68 : vector<4x1xf32>
    %70 = vector.broadcast %48 : vector<4x1xf32> to vector<4x4xf32>
    %71 = arith.subf %31, %70 : vector<4x4xf32>
    %72 = math.exp %71 : vector<4x4xf32>
    %cst_35 = arith.constant dense<0.000000e+00> : vector<4xf32>
    %73 = vector.multi_reduction <add>, %72, %cst_35 [1] : vector<4x4xf32> to vector<4xf32>
    %74 = vector.shape_cast %73 : vector<4xf32> to vector<4x1xf32>
    %75 = arith.addf %69, %74 : vector<4x1xf32>
    %76 = vector.broadcast %48 : vector<4x1xf32> to vector<4x4xf32>
    %77 = arith.subf %34, %76 : vector<4x4xf32>
    %78 = math.exp %77 : vector<4x4xf32>
    %cst_36 = arith.constant dense<0.000000e+00> : vector<4xf32>
    %79 = vector.multi_reduction <add>, %78, %cst_36 [1] : vector<4x4xf32> to vector<4xf32>
    %80 = vector.shape_cast %79 : vector<4xf32> to vector<4x1xf32>
    %81 = arith.addf %75, %80 : vector<4x1xf32>
    %c0_37 = arith.constant 0 : index
    %c0_38 = arith.constant 0 : index
    %82 = vector.load %arg12[%c0_37, %c0_38] : memref<4x1xf32, #tpu.memory_space<vmem>>, vector<4x1xf32>
    tpu.vector_store %arg12[%c0_37, %c0_38], %81 {strides = array<i32>} : memref<4x1xf32, #tpu.memory_space<vmem>>, vector<4x1xf32>,
    %c0_39 = arith.constant 0 : index
    %c0_40 = arith.constant 0 : index
    %83 = vector.load %arg9[%c0_39, %c0_40] : memref<4x1xf32, #tpu.memory_space<vmem>>, vector<4x1xf32>
    tpu.vector_store %arg9[%c0_39, %c0_40], %42 {strides = array<i32>} : memref<4x1xf32, #tpu.memory_space<vmem>>, vector<4x1xf32>,
    %c0_41 = arith.constant 0 : index
    %c0_42 = arith.constant 0 : index
    %84 = vector.load %arg11[%c0_41, %c0_42] : memref<4x1xf32, #tpu.memory_space<vmem>>, vector<4x1xf32>
    tpu.vector_store %arg11[%c0_41, %c0_42], %48 {strides = array<i32>} : memref<4x1xf32, #tpu.memory_space<vmem>>, vector<4x1xf32>,
    %c0_i32_43 = arith.constant 0 : i32
    %85 = arith.cmpi eq, %arg1, %c0_i32_43 : i32
    %86 = arith.extui %85 : i1 to i32
    %c0_i32_44 = arith.constant 0 : i32
    %87 = arith.cmpi ne, %86, %c0_i32_44 : i32
    scf.if %87 {
      %c0_45 = arith.constant 0 : index
      %c0_46 = arith.constant 0 : index
      %88 = vector.load %arg7[%c0_45, %c0_46] : memref<4x128xf32, #tpu.memory_space<vmem>>, vector<4x128xf32>
      %c0_47 = arith.constant 0 : index
      %c0_48 = arith.constant 0 : index
      %89 = vector.load %arg8[%c0_47, %c0_48] : memref<4x128xf32, #tpu.memory_space<vmem>>, vector<4x128xf32>
      %90 = arith.mulf %88, %89 : vector<4x128xf32>
      %cst_49 = arith.constant dense<0.000000e+00> : vector<4xf32>
      %91 = vector.multi_reduction <add>, %90, %cst_49 [1] : vector<4x128xf32> to vector<4xf32>
      %92 = vector.shape_cast %91 : vector<4xf32> to vector<4x1xf32>
      %cst_50 = arith.constant 1.000000e+00 : f32
      %93 = vector.broadcast %cst_50 : f32 to vector<4x1xf32>
      %94 = arith.mulf %93, %92 : vector<4x1xf32>
      %95 = arith.mulf %88, %88 : vector<4x128xf32>
      %cst_51 = arith.constant dense<0.000000e+00> : vector<4xf32>
      %96 = vector.multi_reduction <add>, %95, %cst_51 [1] : vector<4x128xf32> to vector<4xf32>
      %97 = vector.shape_cast %96 : vector<4xf32> to vector<4x1xf32>
      %cst_52 = arith.constant 1.000000e+00 : f32
      %98 = vector.broadcast %cst_52 : f32 to vector<4x1xf32>
      %99 = arith.mulf %98, %97 : vector<4x1xf32>
      %100 = arith.mulf %89, %89 : vector<4x128xf32>
      %cst_53 = arith.constant dense<0.000000e+00> : vector<4xf32>
      %101 = vector.multi_reduction <add>, %100, %cst_53 [1] : vector<4x128xf32> to vector<4xf32>
      %102 = vector.shape_cast %101 : vector<4xf32> to vector<4x1xf32>
      %cst_54 = arith.constant 1.000000e+00 : f32
      %103 = vector.broadcast %cst_54 : f32 to vector<4x1xf32>
      %104 = arith.mulf %103, %102 : vector<4x1xf32>
      %c0_55 = arith.constant 0 : index
      %c0_56 = arith.constant 0 : index
      %105 = vector.load %arg10[%c0_55, %c0_56] : memref<4x1xf32, #tpu.memory_space<vmem>>, vector<4x1xf32>
      %c0_57 = arith.constant 0 : index
      %c0_58 = arith.constant 0 : index
      %106 = vector.load %arg9[%c0_57, %c0_58] : memref<4x1xf32, #tpu.memory_space<vmem>>, vector<4x1xf32>
      %107 = arith.subf %99, %106 : vector<4x1xf32>
      %108 = math.exp %107 : vector<4x1xf32>
      %109 = arith.subf %105, %108 : vector<4x1xf32>
      %cst_59 = arith.constant 1.000000e-30 : f32
      %110 = vector.broadcast %cst_59 : f32 to vector<4x1xf32>
      %111 = arith.maximumf %109, %110 : vector<4x1xf32>
      %c0_60 = arith.constant 0 : index
      %c0_61 = arith.constant 0 : index
      %112 = vector.load %arg12[%c0_60, %c0_61] : memref<4x1xf32, #tpu.memory_space<vmem>>, vector<4x1xf32>
      %c0_62 = arith.constant 0 : index
      %c0_63 = arith.constant 0 : index
      %113 = vector.load %arg11[%c0_62, %c0_63] : memref<4x1xf32, #tpu.memory_space<vmem>>, vector<4x1xf32>
      %114 = arith.subf %104, %113 : vector<4x1xf32>
      %115 = math.exp %114 : vector<4x1xf32>
      %116 = arith.subf %112, %115 : vector<4x1xf32>
      %cst_64 = arith.constant 1.000000e-30 : f32
      %117 = vector.broadcast %cst_64 : f32 to vector<4x1xf32>
      %118 = arith.maximumf %116, %117 : vector<4x1xf32>
      %c0_65 = arith.constant 0 : index
      %c0_66 = arith.constant 0 : index
      %119 = vector.load %arg9[%c0_65, %c0_66] : memref<4x1xf32, #tpu.memory_space<vmem>>, vector<4x1xf32>
      %120 = math.log %111 : vector<4x1xf32>
      %121 = arith.addf %119, %120 : vector<4x1xf32>
      %122 = arith.subf %121, %94 : vector<4x1xf32>
      %c0_67 = arith.constant 0 : index
      %c0_68 = arith.constant 0 : index
      %c0_69 = arith.constant 0 : index
      %123 = vector.load %arg6[%c0_67, %c0_68, %c0_69] : memref<2x4x1xf32, #tpu.memory_space<vmem>>, vector<1x4x1xf32>
      %124 = vector.shape_cast %123 : vector<1x4x1xf32> to vector<4x1xf32>
      %125 = vector.shape_cast %122 : vector<4x1xf32> to vector<1x4x1xf32>
      tpu.vector_store %arg6[%c0_67, %c0_68, %c0_69], %125 {strides = array<i32>} : memref<2x4x1xf32, #tpu.memory_space<vmem>>, vector<1x4x1xf32>,
      %c0_70 = arith.constant 0 : index
      %c0_71 = arith.constant 0 : index
      %126 = vector.load %arg11[%c0_70, %c0_71] : memref<4x1xf32, #tpu.memory_space<vmem>>, vector<4x1xf32>
      %127 = math.log %118 : vector<4x1xf32>
      %128 = arith.addf %126, %127 : vector<4x1xf32>
      %129 = arith.subf %128, %94 : vector<4x1xf32>
      %c1 = arith.constant 1 : index
      %c0_72 = arith.constant 0 : index
      %c0_73 = arith.constant 0 : index
      %130 = vector.load %arg6[%c1, %c0_72, %c0_73] : memref<2x4x1xf32, #tpu.memory_space<vmem>>, vector<1x4x1xf32>
      %131 = vector.shape_cast %130 : vector<1x4x1xf32> to vector<4x1xf32>
      %132 = vector.shape_cast %129 : vector<4x1xf32> to vector<1x4x1xf32>
      tpu.vector_store %arg6[%c1, %c0_72, %c0_73], %132 {strides = array<i32>} : memref<2x4x1xf32, #tpu.memory_space<vmem>>, vector<1x4x1xf32>,
    } else {
    }
    return
  }
  func.func @transform_0(%arg0: i32, %arg1: i32) -> (i32, i32) {
    %c0_i32 = arith.constant 0 : i32
    %c0_i32_0 = arith.constant 0 : i32
    return %arg0, %c0_i32 : i32, i32
  }
  func.func @transform_1(%arg0: i32, %arg1: i32) -> (i32, i32) {
    %c0_i32 = arith.constant 0 : i32
    %c0_i32_0 = arith.constant 0 : i32
    return %arg0, %c0_i32 : i32, i32
  }
  func.func @transform_2(%arg0: i32, %arg1: i32) -> (i32, i32) {
    %c0_i32 = arith.constant 0 : i32
    %c0_i32_0 = arith.constant 0 : i32
    return %arg1, %c0_i32 : i32, i32
  }
  func.func @transform_3(%arg0: i32, %arg1: i32) -> (i32, i32) {
    %c0_i32 = arith.constant 0 : i32
    %c0_i32_0 = arith.constant 0 : i32
    return %arg1, %c0_i32 : i32, i32
  }
  func.func @transform_4(%arg0: i32, %arg1: i32) -> (i32, i32, i32) {
    %c0_i32 = arith.constant 0 : i32
    %c0_i32_0 = arith.constant 0 : i32
    %c0_i32_1 = arith.constant 0 : i32
    return %c0_i32, %arg0, %c0_i32_0 : i32, i32, i32
  }
}

</mosaic_0001>

<llo_original>
// kernel: contrastive_clustering_loss.4
$region0: #{contrastive_clustering_loss.4}
  #allocation0 [shape = 'u32[]', space=smem, size = 0x4, offset = 0x4, fixed_abs, tag = 'smem constant byte address 0x4 - core index']
  #allocation1 [shape = 'u32[144,128]{1,0:T(1,128)}', space=vmem, size = 0x12000, scoped, tag = 'internal scratch']
  %s0 = inlined_call_operand.vmem [shape: f32[8,4], index: 0, kind: input, shape index: {}]
  %s1 = inlined_call_operand.vmem [shape: f32[8,4], index: 1, kind: input, shape index: {}]
  %s2 = inlined_call_operand.vmem [shape: f32[4,8], index: 2, kind: output, shape index: {0}]
  %s3 = inlined_call_operand.vmem [shape: f32[4,8], index: 3, kind: output, shape index: {1}]
  %s4 = inlined_call_operand.hbm [shape: f32[1,1], index: 4, kind: output, shape index: {2}]
  %s5 = inlined_call_operand.hbm [shape: f32[1,1], index: 5, kind: output, shape index: {3}]
  %6 = xla_tuple %s2, %s3, %s4, %s5
  %s7 = sld [smem:[#allocation0]]
  $region42: #{contrastive_clustering_loss.4} parent=0
    _
  %s9 = ssub.s32 1, %s7
  %s10 = scalar_select 0, %s9, %s7
  $region1: #{contrastive_clustering_loss.4} parent=0
    #allocation2 [shape = 'u8[512]{0}', space=vmem, size = 0x400, scoped, tag = 'output window, operand 2, single buffered']
    #allocation3 [shape = 's32[1]{0}', space=sflag, size = 0x4, scoped, tag = 'scoped memory for contrastive_clustering_loss.4']
    #allocation4 [shape = 'u8[512]{0}', space=vmem, size = 0x400, scoped, tag = 'output window, operand 3, single buffered']
    #allocation5 [shape = 's32[1]{0}', space=sflag, size = 0x4, scoped, tag = 'scoped memory for contrastive_clustering_loss.4']
    %11 = vsyncpa [#allocation3], 0
    %12 = vsyncpa [#allocation5], 0
    // Predicated region
    $region2: #{contrastive_clustering_loss.4} parent=1 // pred_check
      _
    $region3: #{contrastive_clustering_loss.4} parent=1 // pred_check_branch
      %14 = sbr.rel (0) target = $region5
    $region4: #{contrastive_clustering_loss.4} parent=1 // pred_region
      _
    $region5: #{contrastive_clustering_loss.4} parent=1 // pred_fallthru
      _
    // Predicated region
    $region6: #{contrastive_clustering_loss.4} parent=1 // pred_check
      _
    $region7: #{contrastive_clustering_loss.4} parent=1 // pred_check_branch
      %16 = sbr.rel (0) target = $region9
    $region8: #{contrastive_clustering_loss.4} parent=1 // pred_region
      _
    $region9: #{contrastive_clustering_loss.4} parent=1 // pred_fallthru
      _
    %v17 = vld [vmem:[%s0] sm:$0xff]
    %vm18 = vcmask 31744
    %v19 = vsel %vm18, %v17, -inf
    %20 = vmax.xlane.f32.xlu0 %v19
    %v21 = vpop.xlane.xlu0 %20
    %v22 = vsub.f32 %v17, %v21
    %v23 = vmul.f32 %v22, 1.442695
    %v24 = vpow.pop %v23
    %v25 = vsel %vm18, %v24, 0.0
    %26 = vadd.xlane.f32.xlu0 %v25
    %v27 = vpop.xlane.xlu0 %26
    %v28 = vrcp.pop %v27
    %v29 = vmul.f32 %v24, %v28
    %30 = vxpose.xlu0.b32.start [1/16] %v29, 128
    %31 = vxpose.xlu0.b32.cont [2/16] 0.0, 128
    %32 = vxpose.xlu0.b32.cont [3/16] 0.0, 128
    %33 = vxpose.xlu0.b32.cont [4/16] 0.0, 128
    %34 = vxpose.xlu0.b32.cont [5/16] 0.0, 128
    %35 = vxpose.xlu0.b32.cont [6/16] 0.0, 128
    %36 = vxpose.xlu0.b32.cont [7/16] 0.0, 128
    %37 = vxpose.xlu0.b32.cont [8/16] 0.0, 128
    %38 = vxpose.xlu0.b32.cont [9/16] 0.0, 128
    %39 = vxpose.xlu0.b32.cont [10/16] 0.0, 128
    %40 = vxpose.xlu0.b32.cont [11/16] 0.0, 128
    %41 = vxpose.xlu0.b32.cont [12/16] 0.0, 128
    %42 = vxpose.xlu0.b32.cont [13/16] 0.0, 128
    %43 = vxpose.xlu0.b32.cont [14/16] 0.0, 128
    %44 = vxpose.xlu0.b32.cont [15/16] 0.0, 128
    %45 = vxpose.xlu0.b32.end [16/16] 0.0, 128
    %v46 = vpop.trf.xlu0
    %v47 = vpop.trf.xlu0
    %v48 = vpop.trf.xlu0
    %v49 = vpop.trf.xlu0
    %v50 = vpop.trf.xlu0
    %v51 = vpop.trf.xlu0
    %v52 = vpop.trf.xlu0
    %v53 = vpop.trf.xlu0
    %v54 = vpop.trf.xlu0
    %v55 = vpop.trf.xlu0
    %v56 = vpop.trf.xlu0
    %v57 = vpop.trf.xlu0
    %v58 = vpop.trf.xlu0
    %v59 = vpop.trf.xlu0
    %v60 = vpop.trf.xlu0
    %v61 = vpop.trf.xlu0
    %vm62 = vcmask 60416
    %63 = vst.msk [vmem:[%s2] sm:$0xf] %vm62, %v46
    %v64 = vsel %vm18, %v29, 0.0
    %v65 = vrot.slane %v64, 4
    %v66 = vadd.f32 %v64, %v65
    %v67 = vrot.slane %v66, 2
    %v68 = vadd.f32 %v66, %v67
    %v69 = vrot.slane %v68, 1
    %v70 = vadd.f32 %v68, %v69
    %v71 = vrcp.pop 8.0
    %v72 = vmul.f32 %v70, %v71
    %v73 = vadd.f32 %v72, 1e-10
    %v74 = vlog2.pop %v73
    %v75 = vmul.f32 %v74, 0.6931472
    %v76 = vmul.f32 %v72, %v75
    %v77 = vsel %vm18, %v76, 0.0
    %78 = vadd.xlane.f32.xlu0 %v77
    %v79 = vpop.xlane.xlu0 %78
    %v80 = vsub.f32 0.0, %v79
    %vm81 = vcmask 0
    %82 = vst.msk [vmem:[#allocation2] sm:$0x1] %vm81, %v80
    %v83 = vld [vmem:[%s1] sm:$0xff]
    %v84 = vsel %vm18, %v83, -inf
    %85 = vmax.xlane.f32.xlu0 %v84
    %v86 = vpop.xlane.xlu0 %85
    %v87 = vsub.f32 %v83, %v86
    %v88 = vmul.f32 %v87, 1.442695
    %v89 = vpow.pop %v88
    %v90 = vsel %vm18, %v89, 0.0
    %91 = vadd.xlane.f32.xlu0 %v90
    %v92 = vpop.xlane.xlu0 %91
    %v93 = vrcp.pop %v92
    %v94 = vmul.f32 %v89, %v93
    %95 = vxpose.xlu0.b32.start [1/16] %v94, 128
    %96 = vxpose.xlu0.b32.cont [2/16] 0.0, 128
    %97 = vxpose.xlu0.b32.cont [3/16] 0.0, 128
    %98 = vxpose.xlu0.b32.cont [4/16] 0.0, 128
    %99 = vxpose.xlu0.b32.cont [5/16] 0.0, 128
    %100 = vxpose.xlu0.b32.cont [6/16] 0.0, 128
    %101 = vxpose.xlu0.b32.cont [7/16] 0.0, 128
    %102 = vxpose.xlu0.b32.cont [8/16] 0.0, 128
    %103 = vxpose.xlu0.b32.cont [9/16] 0.0, 128
    %104 = vxpose.xlu0.b32.cont [10/16] 0.0, 128
    %105 = vxpose.xlu0.b32.cont [11/16] 0.0, 128
    %106 = vxpose.xlu0.b32.cont [12/16] 0.0, 128
    %107 = vxpose.xlu0.b32.cont [13/16] 0.0, 128
    %108 = vxpose.xlu0.b32.cont [14/16] 0.0, 128
    %109 = vxpose.xlu0.b32.cont [15/16] 0.0, 128
    %110 = vxpose.xlu0.b32.end [16/16] 0.0, 128
    %v111 = vpop.trf.xlu0
    %v112 = vpop.trf.xlu0
    %v113 = vpop.trf.xlu0
    %v114 = vpop.trf.xlu0
    %v115 = vpop.trf.xlu0
    %v116 = vpop.trf.xlu0
    %v117 = vpop.trf.xlu0
    %v118 = vpop.trf.xlu0
    %v119 = vpop.trf.xlu0
    %v120 = vpop.trf.xlu0
    %v121 = vpop.trf.xlu0
    %v122 = vpop.trf.xlu0
    %v123 = vpop.trf.xlu0
    %v124 = vpop.trf.xlu0
    %v125 = vpop.trf.xlu0
    %v126 = vpop.trf.xlu0
    %127 = vst.msk [vmem:[%s3] sm:$0xf] %vm62, %v111
    %v128 = vsel %vm18, %v94, 0.0
    %v129 = vrot.slane %v128, 4
    %v130 = vadd.f32 %v128, %v129
    %v131 = vrot.slane %v130, 2
    %v132 = vadd.f32 %v130, %v131
    %v133 = vrot.slane %v132, 1
    %v134 = vadd.f32 %v132, %v133
    %v135 = vmul.f32 %v134, %v71
    %v136 = vadd.f32 %v135, 1e-10
    %v137 = vlog2.pop %v136
    %v138 = vmul.f32 %v137, 0.6931472
    %v139 = vmul.f32 %v135, %v138
    %v140 = vsel %vm18, %v139, 0.0
    %141 = vadd.xlane.f32.xlu0 %v140
    %v142 = vpop.xlane.xlu0 %141
    %v143 = vsub.f32 0.0, %v142
    %144 = vst.msk [vmem:[#allocation4] sm:$0x1] %vm81, %v143
    // Predicated region
    $region10: #{contrastive_clustering_loss.4} parent=1 // pred_check
      _
    $region11: #{contrastive_clustering_loss.4} parent=1 // pred_check_branch
      %146 = sbr.rel (0) target = $region13
    $region12: #{contrastive_clustering_loss.4} parent=1 // pred_region
      _
    $region13: #{contrastive_clustering_loss.4} parent=1 // pred_fallthru
      _
    // Predicated region
    $region14: #{contrastive_clustering_loss.4} parent=1 // pred_check
      _
    $region15: #{contrastive_clustering_loss.4} parent=1 // pred_check_branch
      %148 = sbr.rel (0) target = $region17
    $region16: #{contrastive_clustering_loss.4} parent=1 // pred_region
      _
    $region17: #{contrastive_clustering_loss.4} parent=1 // pred_fallthru
      _
    // Predicated region
    $region18: #{contrastive_clustering_loss.4} parent=1 // pred_check
      _
    $region19: #{contrastive_clustering_loss.4} parent=1 // pred_check_branch
      %150 = sbr.rel (0) target = $region21
    $region20: #{contrastive_clustering_loss.4} parent=1 // pred_region
      %s152 = ssub.s32 16, 16
      %153 = vsyncadd [#allocation3], %s152
      %s155 = sshll.u32 [#allocation2], 4
      %s156 = int_to_ptr.vmem [resolvable:$true] %s155
      %158 = dma.vmem_to_hbm [thread:$0]  %s156, 16, %s4, [#allocation3]
    $region21: #{contrastive_clustering_loss.4} parent=1 // pred_fallthru
      _
    // Predicated region
    $region22: #{contrastive_clustering_loss.4} parent=1 // pred_check
      _
    $region23: #{contrastive_clustering_loss.4} parent=1 // pred_check_branch
      %160 = sbr.rel (0) target = $region25
    $region24: #{contrastive_clustering_loss.4} parent=1 // pred_region
      %s162 = ssub.s32 16, 16
      %163 = vsyncadd [#allocation5], %s162
      %s165 = sshll.u32 [#allocation4], 4
      %s166 = int_to_ptr.vmem [resolvable:$true] %s165
      %168 = dma.vmem_to_hbm [thread:$0]  %s166, 16, %s5, [#allocation5]
    $region25: #{contrastive_clustering_loss.4} parent=1 // pred_fallthru
      _
    // Predicated region
    $region26: #{contrastive_clustering_loss.4} parent=1 // pred_check
      _
    $region27: #{contrastive_clustering_loss.4} parent=1 // pred_check_branch
      %170 = sbr.rel (0) target = $region29
    $region28: #{contrastive_clustering_loss.4} parent=1 // pred_region
      _
    $region29: #{contrastive_clustering_loss.4} parent=1 // pred_fallthru
      _
    // Predicated region
    $region30: #{contrastive_clustering_loss.4} parent=1 // pred_check
      _
    $region31: #{contrastive_clustering_loss.4} parent=1 // pred_check_branch
      %172 = sbr.rel (0) target = $region33
    $region32: #{contrastive_clustering_loss.4} parent=1 // pred_region
      _
    $region33: #{contrastive_clustering_loss.4} parent=1 // pred_fallthru
      _
    // Predicated region
    $region34: #{contrastive_clustering_loss.4} parent=1 // pred_check
      _
    $region35: #{contrastive_clustering_loss.4} parent=1 // pred_check_branch
      %174 = sbr.rel (0) target = $region37
    $region36: #{contrastive_clustering_loss.4} parent=1 // pred_region
      %175 = dma.done [#allocation3], 16
    $region37: #{contrastive_clustering_loss.4} parent=1 // pred_fallthru
      _
    // Predicated region
    $region38: #{contrastive_clustering_loss.4} parent=1 // pred_check
      _
    $region39: #{contrastive_clustering_loss.4} parent=1 // pred_check_branch
      %177 = sbr.rel (0) target = $region41
    $region40: #{contrastive_clustering_loss.4} parent=1 // pred_region
      %178 = dma.done [#allocation5], 16
    $region41: #{contrastive_clustering_loss.4} parent=1 // pred_fallthru
      _
    %179 = vsyncpa [#allocation3], 1
    %180 = vsyncpa [#allocation5], 1

// kernel: contrastive_clustering_loss.3
$region0: #{contrastive_clustering_loss.3}
  #allocation0 [shape = 'u32[]', space=smem, size = 0x4, offset = 0x4, fixed_abs, tag = 'smem constant byte address 0x4 - core index']
  #allocation1 [shape = 'u32[144,128]{1,0:T(1,128)}', space=vmem, size = 0x12000, scoped, tag = 'internal scratch']
  #allocation2 [shape = 'bf16[8,128]{1,0:T(8,128)(2,1)}', space=vmem, size = 0x800, scoped, tag = 'scratch operand']
  #allocation3 [shape = 'bf16[8,128]{1,0:T(8,128)(2,1)}', space=vmem, size = 0x800, scoped, tag = 'scratch operand']
  #allocation4 [shape = 'f32[8,1]{1,0:T(8,128)}', space=vmem, size = 0x1000, scoped, tag = 'scratch operand']
  #allocation5 [shape = 'f32[8,1]{1,0:T(8,128)}', space=vmem, size = 0x1000, scoped, tag = 'scratch operand']
  #allocation6 [shape = 'f32[8,1]{1,0:T(8,128)}', space=vmem, size = 0x1000, scoped, tag = 'scratch operand']
  #allocation7 [shape = 'f32[8,1]{1,0:T(8,128)}', space=vmem, size = 0x1000, scoped, tag = 'scratch operand']
  %s0 = inlined_call_operand.vmem [shape: f32[8,128], index: 0, kind: input, shape index: {}, may-alias: {0,2}]
  %s1 = inlined_call_operand.vmem [shape: f32[8,128], index: 1, kind: input, shape index: {}, may-alias: {1,3}]
  %s2 = inlined_call_operand.vmem [shape: f32[8,128], index: 2, kind: input, shape index: {}, may-alias: {0,2}]
  %s3 = inlined_call_operand.vmem [shape: f32[8,128], index: 3, kind: input, shape index: {}, may-alias: {1,3}]
  %s4 = inlined_call_operand.vmem [shape: f32[2,8,1], index: 4, kind: output, shape index: {}]
  %s5 = sld [smem:[#allocation0]]
  $region34: #{contrastive_clustering_loss.3} parent=0
    _
  %s7 = ssub.s32 1, %s5
  %s8 = scalar_select 0, %s7, %s5
  // Predicated region
  $region2: #{contrastive_clustering_loss.3} parent=0 // pred_check
    _
  $region3: #{contrastive_clustering_loss.3} parent=0 // pred_check_branch
    %10 = sbr.rel (0) target = $region5
  $region4: #{contrastive_clustering_loss.3} parent=0 // pred_region
    _
  $region5: #{contrastive_clustering_loss.3} parent=0 // pred_fallthru
    _
  // Predicated region
  $region6: #{contrastive_clustering_loss.3} parent=0 // pred_check
    _
  $region7: #{contrastive_clustering_loss.3} parent=0 // pred_check_branch
    %12 = sbr.rel (0) target = $region9
  $region8: #{contrastive_clustering_loss.3} parent=0 // pred_region
    _
  $region9: #{contrastive_clustering_loss.3} parent=0 // pred_fallthru
    _
  // Predicated region
  $region10: #{contrastive_clustering_loss.3} parent=0 // pred_check
    _
  $region11: #{contrastive_clustering_loss.3} parent=0 // pred_check_branch
    %14 = sbr.rel (0) target = $region13
  $region12: #{contrastive_clustering_loss.3} parent=0 // pred_region
    _
  $region13: #{contrastive_clustering_loss.3} parent=0 // pred_fallthru
    _
  // Predicated region
  $region14: #{contrastive_clustering_loss.3} parent=0 // pred_check
    _
  $region15: #{contrastive_clustering_loss.3} parent=0 // pred_check_branch
    %16 = sbr.rel (0) target = $region17
  $region16: #{contrastive_clustering_loss.3} parent=0 // pred_region
    _
  $region17: #{contrastive_clustering_loss.3} parent=0 // pred_fallthru
    _
  %p18 = scmp.eq.s32.totalorder 0, 0
  // Predicated region
  $region18: #{contrastive_clustering_loss.3} parent=0 // pred_check
    %p19 = pneg %p18
  $region19: #{contrastive_clustering_loss.3} parent=0 // pred_check_branch
    %21 = sbr.rel (%p19) target = $region21
  $region20: #{contrastive_clustering_loss.3} parent=0 // pred_region
    %vm22 = vcmask 7168
    %23 = vst.msk [vmem:[#allocation4] sm:$0xff] %vm22, -inf
    %24 = vst.msk [vmem:[#allocation6] sm:$0xff] %vm22, -inf
    %25 = vst.msk [vmem:[#allocation5] sm:$0xff] %vm22, 0.0
    %26 = vst.msk [vmem:[#allocation7] sm:$0xff] %vm22, 0.0
    %v27 = vld [vmem:[%s0] sm:$0xff]
    %v28 = vmul.f32 %v27, %v27
    %29 = vadd.xlane.f32.xlu0 %v28
    %v30 = vpop.xlane.xlu0 %29
    %v31 = vmax.f32 %v30, 1e-24
    %v32 = vrsqrt.pop %v31
    %v33 = vmul.f32 %v27, %v32
    %v34 = vpack.c.bf16 %v33, %v33
    %35 = vst [vmem:[#allocation2] sm:$0xf] %v34
    %v36 = vld [vmem:[%s1] sm:$0xff]
    %v37 = vmul.f32 %v36, %v36
    %38 = vadd.xlane.f32.xlu0 %v37
    %v39 = vpop.xlane.xlu0 %38
    %v40 = vmax.f32 %v39, 1e-24
    %v41 = vrsqrt.pop %v40
    %v42 = vmul.f32 %v36, %v41
    %v43 = vpack.c.bf16 %v42, %v42
    %44 = vst [vmem:[#allocation3] sm:$0xf] %v43
  $region21: #{contrastive_clustering_loss.3} parent=0 // pred_fallthru
    _
  %v45 = vld [vmem:[#allocation2] sm:$0xf]
  %v46 = vld [vmem:[#allocation3] sm:$0xf]
  %v47 = vld [vmem:[%s2] sm:$0xff]
  %v48 = vmul.f32 %v47, %v47
  %49 = vadd.xlane.f32.xlu0 %v48
  %v50 = vpop.xlane.xlu0 %49
  %v51 = vmax.f32 %v50, 1e-24
  %v52 = vrsqrt.pop %v51
  %v53 = vmul.f32 %v47, %v52
  %v54 = vpack.c.bf16 %v53, %v53
  %v55 = vld [vmem:[%s3] sm:$0xff]
  %v56 = vmul.f32 %v55, %v55
  %57 = vadd.xlane.f32.xlu0 %v56
  %v58 = vpop.xlane.xlu0 %57
  %v59 = vmax.f32 %v58, 1e-24
  %v60 = vrsqrt.pop %v59
  %v61 = vmul.f32 %v55, %v60
  %v62 = vpack.c.bf16 %v61, %v61
  %63 = vmatprep.subr.bf16.mxu0 0
  %64 = vmatpush1.bf16.xpose.msra.mxu0 0
  %65 = vmatprep.subr.bf16.mxu0 0
  %66 = vmatpush1.bf16.xpose.msra.mxu0 0
  %67 = vmatprep.subr.bf16.mxu0 0
  %68 = vmatpush1.bf16.xpose.msra.mxu0 0
  %69 = vmatprep.subr.bf16.mxu0 0
  %70 = vmatpush1.bf16.xpose.msra.mxu0 0
  %71 = vmatprep.subr.bf16.mxu0 0
  %72 = vmatpush1.bf16.xpose.msra.mxu0 0
  %73 = vmatprep.subr.bf16.mxu0 0
  %74 = vmatpush1.bf16.xpose.msra.mxu0 0
  %75 = vmatprep.subr.bf16.mxu0 0
  %76 = vmatpush1.bf16.xpose.msra.mxu0 0
  %77 = vmatprep.subr.bf16.mxu0 0
  %78 = vmatpush1.bf16.xpose.msra.mxu0 %v54
  %79 = vmatprep.subr.bf16.mxu0 0
  %80 = vmatpush2.bf16.xpose.msra.mxu0 0
  %81 = vmatprep.subr.bf16.mxu0 0
  %82 = vmatpush2.bf16.xpose.msra.mxu0 0
  %83 = vmatprep.subr.bf16.mxu0 0
  %84 = vmatpush2.bf16.xpose.msra.mxu0 0
  %85 = vmatprep.subr.bf16.mxu0 0
  %86 = vmatpush2.bf16.xpose.msra.mxu0 0
  %87 = vmatprep.subr.bf16.mxu0 0
  %88 = vmatpush2.bf16.xpose.msra.mxu0 0
  %89 = vmatprep.subr.bf16.mxu0 0
  %90 = vmatpush2.bf16.xpose.msra.mxu0 0
  %91 = vmatprep.subr.bf16.mxu0 0
  %92 = vmatpush2.bf16.xpose.msra.mxu0 0
  %93 = vmatprep.subr.bf16.mxu0 0
  %94 = vmatpush2.bf16.xpose.msra.mxu0 0
  %95 = vmatprep.mubr.bf16.mxu0 0
  %96 = vmatmul.mubr.bf16.gmra.mxu0 %v45
  %v97 = vpop.f32.mrf.mxu0
  %v98 = vadd.f32 0.0, %v97
  %v99 = vpop.f32.mrf.mxu0
  %v100 = vpop.f32.mrf.mxu0
  %v101 = vpop.f32.mrf.mxu0
  %102 = vdwg.mxu0
  %v103 = vmul.f32 %v98, 2.0
  %104 = vmatprep.subr.bf16.mxu0 0
  %105 = vmatpush1.bf16.xpose.msra.mxu0 0
  %106 = vmatprep.subr.bf16.mxu0 0
  %107 = vmatpush1.bf16.xpose.msra.mxu0 0
  %108 = vmatprep.subr.bf16.mxu0 0
  %109 = vmatpush1.bf16.xpose.msra.mxu0 0
  %110 = vmatprep.subr.bf16.mxu0 0
  %111 = vmatpush1.bf16.xpose.msra.mxu0 0
  %112 = vmatprep.subr.bf16.mxu0 0
  %113 = vmatpush1.bf16.xpose.msra.mxu0 0
  %114 = vmatprep.subr.bf16.mxu0 0
  %115 = vmatpush1.bf16.xpose.msra.mxu0 0
  %116 = vmatprep.subr.bf16.mxu0 0
  %117 = vmatpush1.bf16.xpose.msra.mxu0 0
  %118 = vmatprep.subr.bf16.mxu0 0
  %119 = vmatpush1.bf16.xpose.msra.mxu0 %v62
  %120 = vmatprep.subr.bf16.mxu0 0
  %121 = vmatpush2.bf16.xpose.msra.mxu0 0
  %122 = vmatprep.subr.bf16.mxu0 0
  %123 = vmatpush2.bf16.xpose.msra.mxu0 0
  %124 = vmatprep.subr.bf16.mxu0 0
  %125 = vmatpush2.bf16.xpose.msra.mxu0 0
  %126 = vmatprep.subr.bf16.mxu0 0
  %127 = vmatpush2.bf16.xpose.msra.mxu0 0
  %128 = vmatprep.subr.bf16.mxu0 0
  %129 = vmatpush2.bf16.xpose.msra.mxu0 0
  %130 = vmatprep.subr.bf16.mxu0 0
  %131 = vmatpush2.bf16.xpose.msra.mxu0 0
  %132 = vmatprep.subr.bf16.mxu0 0
  %133 = vmatpush2.bf16.xpose.msra.mxu0 0
  %134 = vmatprep.subr.bf16.mxu0 0
  %135 = vmatpush2.bf16.xpose.msra.mxu0 0
  %136 = vmatprep.mubr.bf16.mxu0 0
  %137 = vmatmul.mubr.bf16.gmra.mxu0 %v45
  %v138 = vpop.f32.mrf.mxu0
  %v139 = vadd.f32 0.0, %v138
  %v140 = vpop.f32.mrf.mxu0
  %v141 = vpop.f32.mrf.mxu0
  %v142 = vpop.f32.mrf.mxu0
  %143 = vdwg.mxu0
  %v144 = vmul.f32 %v139, 2.0
  %145 = vmatprep.subr.bf16.mxu0 0
  %146 = vmatpush1.bf16.xpose.msra.mxu0 0
  %147 = vmatprep.subr.bf16.mxu0 0
  %148 = vmatpush1.bf16.xpose.msra.mxu0 0
  %149 = vmatprep.subr.bf16.mxu0 0
  %150 = vmatpush1.bf16.xpose.msra.mxu0 0
  %151 = vmatprep.subr.bf16.mxu0 0
  %152 = vmatpush1.bf16.xpose.msra.mxu0 0
  %153 = vmatprep.subr.bf16.mxu0 0
  %154 = vmatpush1.bf16.xpose.msra.mxu0 0
  %155 = vmatprep.subr.bf16.mxu0 0
  %156 = vmatpush1.bf16.xpose.msra.mxu0 0
  %157 = vmatprep.subr.bf16.mxu0 0
  %158 = vmatpush1.bf16.xpose.msra.mxu0 0
  %159 = vmatprep.subr.bf16.mxu0 0
  %160 = vmatpush1.bf16.xpose.msra.mxu0 %v54
  %161 = vmatprep.subr.bf16.mxu0 0
  %162 = vmatpush2.bf16.xpose.msra.mxu0 0
  %163 = vmatprep.subr.bf16.mxu0 0
  %164 = vmatpush2.bf16.xpose.msra.mxu0 0
  %165 = vmatprep.subr.bf16.mxu0 0
  %166 = vmatpush2.bf16.xpose.msra.mxu0 0
  %167 = vmatprep.subr.bf16.mxu0 0
  %168 = vmatpush2.bf16.xpose.msra.mxu0 0
  %169 = vmatprep.subr.bf16.mxu0 0
  %170 = vmatpush2.bf16.xpose.msra.mxu0 0
  %171 = vmatprep.subr.bf16.mxu0 0
  %172 = vmatpush2.bf16.xpose.msra.mxu0 0
  %173 = vmatprep.subr.bf16.mxu0 0
  %174 = vmatpush2.bf16.xpose.msra.mxu0 0
  %175 = vmatprep.subr.bf16.mxu0 0
  %176 = vmatpush2.bf16.xpose.msra.mxu0 0
  %177 = vmatprep.mubr.bf16.mxu0 0
  %178 = vmatmul.mubr.bf16.gmra.mxu0 %v46
  %v179 = vpop.f32.mrf.mxu0
  %v180 = vadd.f32 0.0, %v179
  %v181 = vpop.f32.mrf.mxu0
  %v182 = vpop.f32.mrf.mxu0
  %v183 = vpop.f32.mrf.mxu0
  %184 = vdwg.mxu0
  %v185 = vmul.f32 %v180, 2.0
  %186 = vmatprep.subr.bf16.mxu0 0
  %187 = vmatpush1.bf16.xpose.msra.mxu0 0
  %188 = vmatprep.subr.bf16.mxu0 0
  %189 = vmatpush1.bf16.xpose.msra.mxu0 0
  %190 = vmatprep.subr.bf16.mxu0 0
  %191 = vmatpush1.bf16.xpose.msra.mxu0 0
  %192 = vmatprep.subr.bf16.mxu0 0
  %193 = vmatpush1.bf16.xpose.msra.mxu0 0
  %194 = vmatprep.subr.bf16.mxu0 0
  %195 = vmatpush1.bf16.xpose.msra.mxu0 0
  %196 = vmatprep.subr.bf16.mxu0 0
  %197 = vmatpush1.bf16.xpose.msra.mxu0 0
  %198 = vmatprep.subr.bf16.mxu0 0
  %199 = vmatpush1.bf16.xpose.msra.mxu0 0
  %200 = vmatprep.subr.bf16.mxu0 0
  %201 = vmatpush1.bf16.xpose.msra.mxu0 %v62
  %202 = vmatprep.subr.bf16.mxu0 0
  %203 = vmatpush2.bf16.xpose.msra.mxu0 0
  %204 = vmatprep.subr.bf16.mxu0 0
  %205 = vmatpush2.bf16.xpose.msra.mxu0 0
  %206 = vmatprep.subr.bf16.mxu0 0
  %207 = vmatpush2.bf16.xpose.msra.mxu0 0
  %208 = vmatprep.subr.bf16.mxu0 0
  %209 = vmatpush2.bf16.xpose.msra.mxu0 0
  %210 = vmatprep.subr.bf16.mxu0 0
  %211 = vmatpush2.bf16.xpose.msra.mxu0 0
  %212 = vmatprep.subr.bf16.mxu0 0
  %213 = vmatpush2.bf16.xpose.msra.mxu0 0
  %214 = vmatprep.subr.bf16.mxu0 0
  %215 = vmatpush2.bf16.xpose.msra.mxu0 0
  %216 = vmatprep.subr.bf16.mxu0 0
  %217 = vmatpush2.bf16.xpose.msra.mxu0 0
  %218 = vmatprep.mubr.bf16.mxu0 0
  %219 = vmatmul.mubr.bf16.gmra.mxu0 %v46
  %v220 = vpop.f32.mrf.mxu0
  %v221 = vadd.f32 0.0, %v220
  %v222 = vpop.f32.mrf.mxu0
  %v223 = vpop.f32.mrf.mxu0
  %v224 = vpop.f32.mrf.mxu0
  %225 = vdwg.mxu0
  %v226 = vmul.f32 %v221, 2.0
  %v227 = vld [vmem:[#allocation4] sm:$0xff]
  %v228 = vld [vmem:[#allocation6] sm:$0xff]
  %vm229 = vcmask 64512
  %v230 = vsel %vm229, %v103, -inf
  %231 = vmax.xlane.f32.xlu0 %v230
  %v232 = vpop.xlane.xlu0 %231
  %v233 = vsel %vm229, %v144, -inf
  %234 = vmax.xlane.f32.xlu0 %v233
  %v235 = vpop.xlane.xlu0 %234
  %v236 = vmax.f32 %v232, %v235
  %v237 = vmax.f32 %v227, %v236
  %v238 = vsel %vm229, %v185, -inf
  %239 = vmax.xlane.f32.xlu0 %v238
  %v240 = vpop.xlane.xlu0 %239
  %v241 = vsel %vm229, %v226, -inf
  %242 = vmax.xlane.f32.xlu0 %v241
  %v243 = vpop.xlane.xlu0 %242
  %v244 = vmax.f32 %v240, %v243
  %v245 = vmax.f32 %v228, %v244
  %v246 = vsub.f32 %v227, %v237
  %v247 = vmul.f32 %v246, 1.442695
  %v248 = vpow.pop %v247
  %v249 = vld [vmem:[#allocation5] sm:$0xff]
  %v250 = vmul.f32 %v248, %v249
  %252 = vset.pattern.permute.xlu0 0
  %253 = vperm.xlu0 %252, %v237
  %v254 = vpop.permute.xlu0 %253
  %v256 = vsub.f32 %v103, %v254
  %v257 = vmul.f32 %v256, 1.442695
  %v258 = vpow.pop %v257
  %v259 = vsel %vm229, %v258, 0.0
  %260 = vadd.xlane.f32.xlu0 %v259
  %v261 = vpop.xlane.xlu0 %260
  %v262 = vadd.f32 %v250, %v261
  %v263 = vsub.f32 %v144, %v254
  %v264 = vmul.f32 %v263, 1.442695
  %v265 = vpow.pop %v264
  %v266 = vsel %vm229, %v265, 0.0
  %267 = vadd.xlane.f32.xlu0 %v266
  %v268 = vpop.xlane.xlu0 %267
  %v269 = vadd.f32 %v262, %v268
  %vm270 = vcmask 7168
  %271 = vst.msk [vmem:[#allocation5] sm:$0xff] %vm270, %v269
  %v272 = vsub.f32 %v228, %v245
  %v273 = vmul.f32 %v272, 1.442695
  %v274 = vpow.pop %v273
  %v275 = vld [vmem:[#allocation7] sm:$0xff]
  %v276 = vmul.f32 %v274, %v275
  %278 = vset.pattern.permute.xlu0 0
  %279 = vperm.xlu0 %278, %v245
  %v280 = vpop.permute.xlu0 %279
  %v282 = vsub.f32 %v185, %v280
  %v283 = vmul.f32 %v282, 1.442695
  %v284 = vpow.pop %v283
  %v285 = vsel %vm229, %v284, 0.0
  %286 = vadd.xlane.f32.xlu0 %v285
  %v287 = vpop.xlane.xlu0 %286
  %v288 = vadd.f32 %v276, %v287
  %v289 = vsub.f32 %v226, %v280
  %v290 = vmul.f32 %v289, 1.442695
  %v291 = vpow.pop %v290
  %v292 = vsel %vm229, %v291, 0.0
  %293 = vadd.xlane.f32.xlu0 %v292
  %v294 = vpop.xlane.xlu0 %293
  %v295 = vadd.f32 %v288, %v294
  %296 = vst.msk [vmem:[#allocation7] sm:$0xff] %vm270, %v295
  %297 = vst.msk [vmem:[#allocation4] sm:$0xff] %vm270, %v237
  %298 = vst.msk [vmem:[#allocation6] sm:$0xff] %vm270, %v245
  // Predicated region
  $region22: #{contrastive_clustering_loss.3} parent=0 // pred_check
    %p299 = pneg %p18
  $region23: #{contrastive_clustering_loss.3} parent=0 // pred_check_branch
    %301 = sbr.rel (%p299) target = $region25
  $region24: #{contrastive_clustering_loss.3} parent=0 // pred_region
    %v302 = vld [vmem:[#allocation2] sm:$0xf]
    %v303 = vunpack.c.l.bf16 %v302
    %v304 = vld [vmem:[#allocation3] sm:$0xf]
    %v305 = vunpack.c.l.bf16 %v304
    %v306 = vmul.f32 %v303, %v305
    %307 = vadd.xlane.f32.xlu0 %v306
    %v308 = vpop.xlane.xlu0 %307
    %v309 = vmul.f32 %v308, 2.0
    %v310 = vmul.f32 %v303, %v303
    %311 = vadd.xlane.f32.xlu0 %v310
    %v312 = vpop.xlane.xlu0 %311
    %v313 = vmul.f32 %v312, 2.0
    %v314 = vmul.f32 %v305, %v305
    %315 = vadd.xlane.f32.xlu0 %v314
    %v316 = vpop.xlane.xlu0 %315
    %v317 = vmul.f32 %v316, 2.0
    %v318 = vld [vmem:[#allocation5] sm:$0xff]
    %v319 = vld [vmem:[#allocation4] sm:$0xff]
    %v320 = vsub.f32 %v313, %v319
    %v321 = vmul.f32 %v320, 1.442695
    %v322 = vpow.pop %v321
    %v323 = vsub.f32 %v318, %v322
    %v324 = vmax.f32 %v323, 1e-30
    %v325 = vld [vmem:[#allocation7] sm:$0xff]
    %v326 = vld [vmem:[#allocation6] sm:$0xff]
    %v327 = vsub.f32 %v317, %v326
    %v328 = vmul.f32 %v327, 1.442695
    %v329 = vpow.pop %v328
    %v330 = vsub.f32 %v325, %v329
    %v331 = vmax.f32 %v330, 1e-30
    %v332 = vlog2.pop %v324
    %v333 = vmul.f32 %v332, 0.6931472
    %v334 = vadd.f32 %v319, %v333
    %v335 = vsub.f32 %v334, %v309
    %336 = vst.msk [vmem:[%s4] sm:$0xff] %vm270, %v335
    %v337 = vld [vmem:[#allocation6] sm:$0xff]
    %v338 = vlog2.pop %v331
    %v339 = vmul.f32 %v338, 0.6931472
    %v340 = vadd.f32 %v337, %v339
    %v341 = vsub.f32 %v340, %v309
    %s342 = scalar_lea.vmem %s4, 8
    %343 = vst.msk [vmem:[%s342] sm:$0xff] %vm270, %v341
  $region25: #{contrastive_clustering_loss.3} parent=0 // pred_fallthru
    _
  // Predicated region
  $region26: #{contrastive_clustering_loss.3} parent=0 // pred_check
    _
  $region27: #{contrastive_clustering_loss.3} parent=0 // pred_check_branch
    %345 = sbr.rel (0) target = $region29
  $region28: #{contrastive_clustering_loss.3} parent=0 // pred_region
    _
  $region29: #{contrastive_clustering_loss.3} parent=0 // pred_fallthru
    _
  // Predicated region
  $region30: #{contrastive_clustering_loss.3} parent=0 // pred_check
    _
  $region31: #{contrastive_clustering_loss.3} parent=0 // pred_check_branch
    %347 = sbr.rel (0) target = $region33
  $region32: #{contrastive_clustering_loss.3} parent=0 // pred_region
    _
  $region33: #{contrastive_clustering_loss.3} parent=0 // pred_fallthru
    _

// kernel: contrastive_clustering_loss.5
$region0: #{contrastive_clustering_loss.5}
  #allocation0 [shape = 'u32[]', space=smem, size = 0x4, offset = 0x4, fixed_abs, tag = 'smem constant byte address 0x4 - core index']
  #allocation1 [shape = 'u32[144,128]{1,0:T(1,128)}', space=vmem, size = 0x12000, scoped, tag = 'internal scratch']
  #allocation2 [shape = 'f32[4,128]{1,0:T(4,128)}', space=vmem, size = 0x800, scoped, tag = 'scratch operand']
  #allocation3 [shape = 'f32[4,128]{1,0:T(4,128)}', space=vmem, size = 0x800, scoped, tag = 'scratch operand']
  #allocation4 [shape = 'f32[4,1]{1,0:T(4,128)}', space=vmem, size = 0x800, scoped, tag = 'scratch operand']
  #allocation5 [shape = 'f32[4,1]{1,0:T(4,128)}', space=vmem, size = 0x800, scoped, tag = 'scratch operand']
  #allocation6 [shape = 'f32[4,1]{1,0:T(4,128)}', space=vmem, size = 0x800, scoped, tag = 'scratch operand']
  #allocation7 [shape = 'f32[4,1]{1,0:T(4,128)}', space=vmem, size = 0x800, scoped, tag = 'scratch operand']
  %s0 = inlined_call_operand.vmem [shape: f32[4,128], index: 0, kind: input, shape index: {}, may-alias: {0,2}]
  %s1 = inlined_call_operand.vmem [shape: f32[4,128], index: 1, kind: input, shape index: {}, may-alias: {1,3}]
  %s2 = inlined_call_operand.vmem [shape: f32[4,128], index: 2, kind: input, shape index: {}, may-alias: {0,2}]
  %s3 = inlined_call_operand.vmem [shape: f32[4,128], index: 3, kind: input, shape index: {}, may-alias: {1,3}]
  %s4 = inlined_call_operand.vmem [shape: f32[2,4,1], index: 4, kind: output, shape index: {}]
  %s5 = sld [smem:[#allocation0]]
  $region34: #{contrastive_clustering_loss.5} parent=0
    _
  %s7 = ssub.s32 1, %s5
  %s8 = scalar_select 0, %s7, %s5
  // Predicated region
  $region2: #{contrastive_clustering_loss.5} parent=0 // pred_check
    _
  $region3: #{contrastive_clustering_loss.5} parent=0 // pred_check_branch
    %10 = sbr.rel (0) target = $region5
  $region4: #{contrastive_clustering_loss.5} parent=0 // pred_region
    _
  $region5: #{contrastive_clustering_loss.5} parent=0 // pred_fallthru
    _
  // Predicated region
  $region6: #{contrastive_clustering_loss.5} parent=0 // pred_check
    _
  $region7: #{contrastive_clustering_loss.5} parent=0 // pred_check_branch
    %12 = sbr.rel (0) target = $region9
  $region8: #{contrastive_clustering_loss.5} parent=0 // pred_region
    _
  $region9: #{contrastive_clustering_loss.5} parent=0 // pred_fallthru
    _
  // Predicated region
  $region10: #{contrastive_clustering_loss.5} parent=0 // pred_check
    _
  $region11: #{contrastive_clustering_loss.5} parent=0 // pred_check_branch
    %14 = sbr.rel (0) target = $region13
  $region12: #{contrastive_clustering_loss.5} parent=0 // pred_region
    _
  $region13: #{contrastive_clustering_loss.5} parent=0 // pred_fallthru
    _
  // Predicated region
  $region14: #{contrastive_clustering_loss.5} parent=0 // pred_check
    _
  $region15: #{contrastive_clustering_loss.5} parent=0 // pred_check_branch
    %16 = sbr.rel (0) target = $region17
  $region16: #{contrastive_clustering_loss.5} parent=0 // pred_region
    _
  $region17: #{contrastive_clustering_loss.5} parent=0 // pred_fallthru
    _
  %p17 = scmp.eq.s32.totalorder 0, 0
  // Predicated region
  $region18: #{contrastive_clustering_loss.5} parent=0 // pred_check
    %p18 = pneg %p17
  $region19: #{contrastive_clustering_loss.5} parent=0 // pred_check_branch
    %20 = sbr.rel (%p18) target = $region21
  $region20: #{contrastive_clustering_loss.5} parent=0 // pred_region
    %vm21 = vcmask 3072
    %22 = vst.msk [vmem:[#allocation4] sm:$0xf] %vm21, -inf
    %23 = vst.msk [vmem:[#allocation6] sm:$0xf] %vm21, -inf
    %24 = vst.msk [vmem:[#allocation5] sm:$0xf] %vm21, 0.0
    %25 = vst.msk [vmem:[#allocation7] sm:$0xf] %vm21, 0.0
    %v26 = vld [vmem:[%s0] sm:$0xf]
    %v27 = vmul.f32 %v26, %v26
    %vm28 = vcmask 1043456
    %v29 = vsel %vm28, %v27, 0.0
    %30 = vadd.xlane.f32.xlu0 %v29
    %v31 = vpop.xlane.xlu0 %30
    %v32 = vmax.f32 %v31, 1e-24
    %v33 = vrsqrt.pop %v32
    %v34 = vmul.f32 %v26, %v33
    %35 = vst [vmem:[#allocation2] sm:$0xf] %v34
    %v36 = vld [vmem:[%s1] sm:$0xf]
    %v37 = vmul.f32 %v36, %v36
    %v38 = vsel %vm28, %v37, 0.0
    %39 = vadd.xlane.f32.xlu0 %v38
    %v40 = vpop.xlane.xlu0 %39
    %v41 = vmax.f32 %v40, 1e-24
    %v42 = vrsqrt.pop %v41
    %v43 = vmul.f32 %v36, %v42
    %44 = vst [vmem:[#allocation3] sm:$0xf] %v43
  $region21: #{contrastive_clustering_loss.5} parent=0 // pred_fallthru
    _
  %v45 = vld [vmem:[#allocation2] sm:$0xf]
  %v46 = vld [vmem:[#allocation3] sm:$0xf]
  %v47 = vld [vmem:[%s2] sm:$0xf]
  %v48 = vmul.f32 %v47, %v47
  %vm49 = vcmask 1043456
  %v50 = vsel %vm49, %v48, 0.0
  %51 = vadd.xlane.f32.xlu0 %v50
  %v52 = vpop.xlane.xlu0 %51
  %v53 = vmax.f32 %v52, 1e-24
  %v54 = vrsqrt.pop %v53
  %v55 = vmul.f32 %v47, %v54
  %v56 = vld [vmem:[%s3] sm:$0xf]
  %v57 = vmul.f32 %v56, %v56
  %v58 = vsel %vm49, %v57, 0.0
  %59 = vadd.xlane.f32.xlu0 %v58
  %v60 = vpop.xlane.xlu0 %59
  %v61 = vmax.f32 %v60, 1e-24
  %v62 = vrsqrt.pop %v61
  %v63 = vmul.f32 %v56, %v62
  %64 = vmatprep.subr.mxu0 0.0
  %65 = vmatpush1.xpose.msra.mxu0 0.0
  %66 = vmatprep.subr.mxu0 0.0
  %67 = vmatpush1.xpose.msra.mxu0 0.0
  %68 = vmatprep.subr.mxu0 0.0
  %69 = vmatpush1.xpose.msra.mxu0 0.0
  %70 = vmatprep.subr.mxu0 0.0
  %71 = vmatpush1.xpose.msra.mxu0 0.0
  %72 = vmatprep.subr.mxu0 0.0
  %73 = vmatpush1.xpose.msra.mxu0 0.0
  %74 = vmatprep.subr.mxu0 0.0
  %75 = vmatpush1.xpose.msra.mxu0 0.0
  %76 = vmatprep.subr.mxu0 0.0
  %77 = vmatpush1.xpose.msra.mxu0 0.0
  %78 = vmatprep.subr.mxu0 0.0
  %79 = vmatpush1.xpose.msra.mxu0 0.0
  %80 = vmatprep.subr.mxu0 0.0
  %81 = vmatpush1.xpose.msra.mxu0 0.0
  %82 = vmatprep.subr.mxu0 0.0
  %83 = vmatpush1.xpose.msra.mxu0 0.0
  %84 = vmatprep.subr.mxu0 0.0
  %85 = vmatpush1.xpose.msra.mxu0 0.0
  %86 = vmatprep.subr.mxu0 0.0
  %87 = vmatpush1.xpose.msra.mxu0 0.0
  %88 = vmatprep.subr.mxu0 0.0
  %89 = vmatpush1.xpose.msra.mxu0 0.0
  %90 = vmatprep.subr.mxu0 0.0
  %91 = vmatpush1.xpose.msra.mxu0 0.0
  %92 = vmatprep.subr.mxu0 0.0
  %93 = vmatpush1.xpose.msra.mxu0 0.0
  %94 = vmatprep.subr.mxu0 0.0
  %95 = vmatpush1.xpose.msra.mxu0 %v55
  %96 = vmatprep.subr.mxu0 0.0
  %97 = vmatpush2.xpose.msra.mxu0 0.0
  %98 = vmatprep.subr.mxu0 0.0
  %99 = vmatpush2.xpose.msra.mxu0 0.0
  %100 = vmatprep.subr.mxu0 0.0
  %101 = vmatpush2.xpose.msra.mxu0 0.0
  %102 = vmatprep.subr.mxu0 0.0
  %103 = vmatpush2.xpose.msra.mxu0 0.0
  %104 = vmatprep.subr.mxu0 0.0
  %105 = vmatpush2.xpose.msra.mxu0 0.0
  %106 = vmatprep.subr.mxu0 0.0
  %107 = vmatpush2.xpose.msra.mxu0 0.0
  %108 = vmatprep.subr.mxu0 0.0
  %109 = vmatpush2.xpose.msra.mxu0 0.0
  %110 = vmatprep.subr.mxu0 0.0
  %111 = vmatpush2.xpose.msra.mxu0 0.0
  %112 = vmatprep.subr.mxu0 0.0
  %113 = vmatpush2.xpose.msra.mxu0 0.0
  %114 = vmatprep.subr.mxu0 0.0
  %115 = vmatpush2.xpose.msra.mxu0 0.0
  %116 = vmatprep.subr.mxu0 0.0
  %117 = vmatpush2.xpose.msra.mxu0 0.0
  %118 = vmatprep.subr.mxu0 0.0
  %119 = vmatpush2.xpose.msra.mxu0 0.0
  %120 = vmatprep.subr.mxu0 0.0
  %121 = vmatpush2.xpose.msra.mxu0 0.0
  %122 = vmatprep.subr.mxu0 0.0
  %123 = vmatpush2.xpose.msra.mxu0 0.0
  %124 = vmatprep.subr.mxu0 0.0
  %125 = vmatpush2.xpose.msra.mxu0 0.0
  %126 = vmatprep.subr.mxu0 0.0
  %127 = vmatpush2.xpose.msra.mxu0 0.0
  %128 = vmatprep.mubr.f32.mxu0 0.0
  %129 = vmatmul.mubr.f32.gmra.mxu0 %v45
  %v130 = vpop.f32.mrf.mxu0
  %v131 = vadd.f32 0.0, %v130
  %v132 = vpop.f32.mrf.mxu0
  %133 = vdwg.mxu0
  %134 = vmatprep.subr.mxu0 0.0
  %135 = vmatpush1.xpose.msra.mxu0 0.0
  %136 = vmatprep.subr.mxu0 0.0
  %137 = vmatpush1.xpose.msra.mxu0 0.0
  %138 = vmatprep.subr.mxu0 0.0
  %139 = vmatpush1.xpose.msra.mxu0 0.0
  %140 = vmatprep.subr.mxu0 0.0
  %141 = vmatpush1.xpose.msra.mxu0 0.0
  %142 = vmatprep.subr.mxu0 0.0
  %143 = vmatpush1.xpose.msra.mxu0 0.0
  %144 = vmatprep.subr.mxu0 0.0
  %145 = vmatpush1.xpose.msra.mxu0 0.0
  %146 = vmatprep.subr.mxu0 0.0
  %147 = vmatpush1.xpose.msra.mxu0 0.0
  %148 = vmatprep.subr.mxu0 0.0
  %149 = vmatpush1.xpose.msra.mxu0 0.0
  %150 = vmatprep.subr.mxu0 0.0
  %151 = vmatpush1.xpose.msra.mxu0 0.0
  %152 = vmatprep.subr.mxu0 0.0
  %153 = vmatpush1.xpose.msra.mxu0 0.0
  %154 = vmatprep.subr.mxu0 0.0
  %155 = vmatpush1.xpose.msra.mxu0 0.0
  %156 = vmatprep.subr.mxu0 0.0
  %157 = vmatpush1.xpose.msra.mxu0 0.0
  %158 = vmatprep.subr.mxu0 0.0
  %159 = vmatpush1.xpose.msra.mxu0 0.0
  %160 = vmatprep.subr.mxu0 0.0
  %161 = vmatpush1.xpose.msra.mxu0 0.0
  %162 = vmatprep.subr.mxu0 0.0
  %163 = vmatpush1.xpose.msra.mxu0 0.0
  %164 = vmatprep.subr.mxu0 0.0
  %165 = vmatpush1.xpose.msra.mxu0 %v63
  %166 = vmatprep.subr.mxu0 0.0
  %167 = vmatpush2.xpose.msra.mxu0 0.0
  %168 = vmatprep.subr.mxu0 0.0
  %169 = vmatpush2.xpose.msra.mxu0 0.0
  %170 = vmatprep.subr.mxu0 0.0
  %171 = vmatpush2.xpose.msra.mxu0 0.0
  %172 = vmatprep.subr.mxu0 0.0
  %173 = vmatpush2.xpose.msra.mxu0 0.0
  %174 = vmatprep.subr.mxu0 0.0
  %175 = vmatpush2.xpose.msra.mxu0 0.0
  %176 = vmatprep.subr.mxu0 0.0
  %177 = vmatpush2.xpose.msra.mxu0 0.0
  %178 = vmatprep.subr.mxu0 0.0
  %179 = vmatpush2.xpose.msra.mxu0 0.0
  %180 = vmatprep.subr.mxu0 0.0
  %181 = vmatpush2.xpose.msra.mxu0 0.0
  %182 = vmatprep.subr.mxu0 0.0
  %183 = vmatpush2.xpose.msra.mxu0 0.0
  %184 = vmatprep.subr.mxu0 0.0
  %185 = vmatpush2.xpose.msra.mxu0 0.0
  %186 = vmatprep.subr.mxu0 0.0
  %187 = vmatpush2.xpose.msra.mxu0 0.0
  %188 = vmatprep.subr.mxu0 0.0
  %189 = vmatpush2.xpose.msra.mxu0 0.0
  %190 = vmatprep.subr.mxu0 0.0
  %191 = vmatpush2.xpose.msra.mxu0 0.0
  %192 = vmatprep.subr.mxu0 0.0
  %193 = vmatpush2.xpose.msra.mxu0 0.0
  %194 = vmatprep.subr.mxu0 0.0
  %195 = vmatpush2.xpose.msra.mxu0 0.0
  %196 = vmatprep.subr.mxu0 0.0
  %197 = vmatpush2.xpose.msra.mxu0 0.0
  %198 = vmatprep.mubr.f32.mxu0 0.0
  %199 = vmatmul.mubr.f32.gmra.mxu0 %v45
  %v200 = vpop.f32.mrf.mxu0
  %v201 = vadd.f32 0.0, %v200
  %v202 = vpop.f32.mrf.mxu0
  %203 = vdwg.mxu0
  %204 = vmatprep.subr.mxu0 0.0
  %205 = vmatpush1.xpose.msra.mxu0 0.0
  %206 = vmatprep.subr.mxu0 0.0
  %207 = vmatpush1.xpose.msra.mxu0 0.0
  %208 = vmatprep.subr.mxu0 0.0
  %209 = vmatpush1.xpose.msra.mxu0 0.0
  %210 = vmatprep.subr.mxu0 0.0
  %211 = vmatpush1.xpose.msra.mxu0 0.0
  %212 = vmatprep.subr.mxu0 0.0
  %213 = vmatpush1.xpose.msra.mxu0 0.0
  %214 = vmatprep.subr.mxu0 0.0
  %215 = vmatpush1.xpose.msra.mxu0 0.0
  %216 = vmatprep.subr.mxu0 0.0
  %217 = vmatpush1.xpose.msra.mxu0 0.0
  %218 = vmatprep.subr.mxu0 0.0
  %219 = vmatpush1.xpose.msra.mxu0 0.0
  %220 = vmatprep.subr.mxu0 0.0
  %221 = vmatpush1.xpose.msra.mxu0 0.0
  %222 = vmatprep.subr.mxu0 0.0
  %223 = vmatpush1.xpose.msra.mxu0 0.0
  %224 = vmatprep.subr.mxu0 0.0
  %225 = vmatpush1.xpose.msra.mxu0 0.0
  %226 = vmatprep.subr.mxu0 0.0
  %227 = vmatpush1.xpose.msra.mxu0 0.0
  %228 = vmatprep.subr.mxu0 0.0
  %229 = vmatpush1.xpose.msra.mxu0 0.0
  %230 = vmatprep.subr.mxu0 0.0
  %231 = vmatpush1.xpose.msra.mxu0 0.0
  %232 = vmatprep.subr.mxu0 0.0
  %233 = vmatpush1.xpose.msra.mxu0 0.0
  %234 = vmatprep.subr.mxu0 0.0
  %235 = vmatpush1.xpose.msra.mxu0 %v55
  %236 = vmatprep.subr.mxu0 0.0
  %237 = vmatpush2.xpose.msra.mxu0 0.0
  %238 = vmatprep.subr.mxu0 0.0
  %239 = vmatpush2.xpose.msra.mxu0 0.0
  %240 = vmatprep.subr.mxu0 0.0
  %241 = vmatpush2.xpose.msra.mxu0 0.0
  %242 = vmatprep.subr.mxu0 0.0
  %243 = vmatpush2.xpose.msra.mxu0 0.0
  %244 = vmatprep.subr.mxu0 0.0
  %245 = vmatpush2.xpose.msra.mxu0 0.0
  %246 = vmatprep.subr.mxu0 0.0
  %247 = vmatpush2.xpose.msra.mxu0 0.0
  %248 = vmatprep.subr.mxu0 0.0
  %249 = vmatpush2.xpose.msra.mxu0 0.0
  %250 = vmatprep.subr.mxu0 0.0
  %251 = vmatpush2.xpose.msra.mxu0 0.0
  %252 = vmatprep.subr.mxu0 0.0
  %253 = vmatpush2.xpose.msra.mxu0 0.0
  %254 = vmatprep.subr.mxu0 0.0
  %255 = vmatpush2.xpose.msra.mxu0 0.0
  %256 = vmatprep.subr.mxu0 0.0
  %257 = vmatpush2.xpose.msra.mxu0 0.0
  %258 = vmatprep.subr.mxu0 0.0
  %259 = vmatpush2.xpose.msra.mxu0 0.0
  %260 = vmatprep.subr.mxu0 0.0
  %261 = vmatpush2.xpose.msra.mxu0 0.0
  %262 = vmatprep.subr.mxu0 0.0
  %263 = vmatpush2.xpose.msra.mxu0 0.0
  %264 = vmatprep.subr.mxu0 0.0
  %265 = vmatpush2.xpose.msra.mxu0 0.0
  %266 = vmatprep.subr.mxu0 0.0
  %267 = vmatpush2.xpose.msra.mxu0 0.0
  %268 = vmatprep.mubr.f32.mxu0 0.0
  %269 = vmatmul.mubr.f32.gmra.mxu0 %v46
  %v270 = vpop.f32.mrf.mxu0
  %v271 = vadd.f32 0.0, %v270
  %v272 = vpop.f32.mrf.mxu0
  %273 = vdwg.mxu0
  %274 = vmatprep.subr.mxu0 0.0
  %275 = vmatpush1.xpose.msra.mxu0 0.0
  %276 = vmatprep.subr.mxu0 0.0
  %277 = vmatpush1.xpose.msra.mxu0 0.0
  %278 = vmatprep.subr.mxu0 0.0
  %279 = vmatpush1.xpose.msra.mxu0 0.0
  %280 = vmatprep.subr.mxu0 0.0
  %281 = vmatpush1.xpose.msra.mxu0 0.0
  %282 = vmatprep.subr.mxu0 0.0
  %283 = vmatpush1.xpose.msra.mxu0 0.0
  %284 = vmatprep.subr.mxu0 0.0
  %285 = vmatpush1.xpose.msra.mxu0 0.0
  %286 = vmatprep.subr.mxu0 0.0
  %287 = vmatpush1.xpose.msra.mxu0 0.0
  %288 = vmatprep.subr.mxu0 0.0
  %289 = vmatpush1.xpose.msra.mxu0 0.0
  %290 = vmatprep.subr.mxu0 0.0
  %291 = vmatpush1.xpose.msra.mxu0 0.0
  %292 = vmatprep.subr.mxu0 0.0
  %293 = vmatpush1.xpose.msra.mxu0 0.0
  %294 = vmatprep.subr.mxu0 0.0
  %295 = vmatpush1.xpose.msra.mxu0 0.0
  %296 = vmatprep.subr.mxu0 0.0
  %297 = vmatpush1.xpose.msra.mxu0 0.0
  %298 = vmatprep.subr.mxu0 0.0
  %299 = vmatpush1.xpose.msra.mxu0 0.0
  %300 = vmatprep.subr.mxu0 0.0
  %301 = vmatpush1.xpose.msra.mxu0 0.0
  %302 = vmatprep.subr.mxu0 0.0
  %303 = vmatpush1.xpose.msra.mxu0 0.0
  %304 = vmatprep.subr.mxu0 0.0
  %305 = vmatpush1.xpose.msra.mxu0 %v63
  %306 = vmatprep.subr.mxu0 0.0
  %307 = vmatpush2.xpose.msra.mxu0 0.0
  %308 = vmatprep.subr.mxu0 0.0
  %309 = vmatpush2.xpose.msra.mxu0 0.0
  %310 = vmatprep.subr.mxu0 0.0
  %311 = vmatpush2.xpose.msra.mxu0 0.0
  %312 = vmatprep.subr.mxu0 0.0
  %313 = vmatpush2.xpose.msra.mxu0 0.0
  %314 = vmatprep.subr.mxu0 0.0
  %315 = vmatpush2.xpose.msra.mxu0 0.0
  %316 = vmatprep.subr.mxu0 0.0
  %317 = vmatpush2.xpose.msra.mxu0 0.0
  %318 = vmatprep.subr.mxu0 0.0
  %319 = vmatpush2.xpose.msra.mxu0 0.0
  %320 = vmatprep.subr.mxu0 0.0
  %321 = vmatpush2.xpose.msra.mxu0 0.0
  %322 = vmatprep.subr.mxu0 0.0
  %323 = vmatpush2.xpose.msra.mxu0 0.0
  %324 = vmatprep.subr.mxu0 0.0
  %325 = vmatpush2.xpose.msra.mxu0 0.0
  %326 = vmatprep.subr.mxu0 0.0
  %327 = vmatpush2.xpose.msra.mxu0 0.0
  %328 = vmatprep.subr.mxu0 0.0
  %329 = vmatpush2.xpose.msra.mxu0 0.0
  %330 = vmatprep.subr.mxu0 0.0
  %331 = vmatpush2.xpose.msra.mxu0 0.0
  %332 = vmatprep.subr.mxu0 0.0
  %333 = vmatpush2.xpose.msra.mxu0 0.0
  %334 = vmatprep.subr.mxu0 0.0
  %335 = vmatpush2.xpose.msra.mxu0 0.0
  %336 = vmatprep.subr.mxu0 0.0
  %337 = vmatpush2.xpose.msra.mxu0 0.0
  %338 = vmatprep.mubr.f32.mxu0 0.0
  %339 = vmatmul.mubr.f32.gmra.mxu0 %v46
  %v340 = vpop.f32.mrf.mxu0
  %v341 = vadd.f32 0.0, %v340
  %v342 = vpop.f32.mrf.mxu0
  %343 = vdwg.mxu0
  %v344 = vld [vmem:[#allocation4] sm:$0xf]
  %v345 = vld [vmem:[#allocation6] sm:$0xf]
  %vm346 = vcmask 27648
  %v347 = vsel %vm346, %v131, -inf
  %348 = vmax.xlane.f32.xlu0 %v347
  %v349 = vpop.xlane.xlu0 %348
  %v350 = vsel %vm346, %v201, -inf
  %351 = vmax.xlane.f32.xlu0 %v350
  %v352 = vpop.xlane.xlu0 %351
  %v353 = vmax.f32 %v349, %v352
  %v354 = vmax.f32 %v344, %v353
  %v355 = vsel %vm346, %v271, -inf
  %356 = vmax.xlane.f32.xlu0 %v355
  %v357 = vpop.xlane.xlu0 %356
  %v358 = vsel %vm346, %v341, -inf
  %359 = vmax.xlane.f32.xlu0 %v358
  %v360 = vpop.xlane.xlu0 %359
  %v361 = vmax.f32 %v357, %v360
  %v362 = vmax.f32 %v345, %v361
  %v363 = vsub.f32 %v344, %v354
  %v364 = vmul.f32 %v363, 1.442695
  %v365 = vpow.pop %v364
  %v366 = vld [vmem:[#allocation5] sm:$0xf]
  %v367 = vmul.f32 %v365, %v366
  %369 = vset.pattern.permute.xlu0 0
  %370 = vperm.xlu0 %369, %v354
  %v371 = vpop.permute.xlu0 %370
  %v373 = vsub.f32 %v131, %v371
  %v374 = vmul.f32 %v373, 1.442695
  %v375 = vpow.pop %v374
  %v376 = vsel %vm346, %v375, 0.0
  %377 = vadd.xlane.f32.xlu0 %v376
  %v378 = vpop.xlane.xlu0 %377
  %v379 = vadd.f32 %v367, %v378
  %v380 = vsub.f32 %v201, %v371
  %v381 = vmul.f32 %v380, 1.442695
  %v382 = vpow.pop %v381
  %v383 = vsel %vm346, %v382, 0.0
  %384 = vadd.xlane.f32.xlu0 %v383
  %v385 = vpop.xlane.xlu0 %384
  %v386 = vadd.f32 %v379, %v385
  %vm387 = vcmask 3072
  %388 = vst.msk [vmem:[#allocation5] sm:$0xf] %vm387, %v386
  %v389 = vsub.f32 %v345, %v362
  %v390 = vmul.f32 %v389, 1.442695
  %v391 = vpow.pop %v390
  %v392 = vld [vmem:[#allocation7] sm:$0xf]
  %v393 = vmul.f32 %v391, %v392
  %395 = vset.pattern.permute.xlu0 0
  %396 = vperm.xlu0 %395, %v362
  %v397 = vpop.permute.xlu0 %396
  %v399 = vsub.f32 %v271, %v397
  %v400 = vmul.f32 %v399, 1.442695
  %v401 = vpow.pop %v400
  %v402 = vsel %vm346, %v401, 0.0
  %403 = vadd.xlane.f32.xlu0 %v402
  %v404 = vpop.xlane.xlu0 %403
  %v405 = vadd.f32 %v393, %v404
  %v406 = vsub.f32 %v341, %v397
  %v407 = vmul.f32 %v406, 1.442695
  %v408 = vpow.pop %v407
  %v409 = vsel %vm346, %v408, 0.0
  %410 = vadd.xlane.f32.xlu0 %v409
  %v411 = vpop.xlane.xlu0 %410
  %v412 = vadd.f32 %v405, %v411
  %413 = vst.msk [vmem:[#allocation7] sm:$0xf] %vm387, %v412
  %414 = vst.msk [vmem:[#allocation4] sm:$0xf] %vm387, %v354
  %415 = vst.msk [vmem:[#allocation6] sm:$0xf] %vm387, %v362
  // Predicated region
  $region22: #{contrastive_clustering_loss.5} parent=0 // pred_check
    %p416 = pneg %p17
  $region23: #{contrastive_clustering_loss.5} parent=0 // pred_check_branch
    %418 = sbr.rel (%p416) target = $region25
  $region24: #{contrastive_clustering_loss.5} parent=0 // pred_region
    %v419 = vld [vmem:[#allocation2] sm:$0xf]
    %v420 = vld [vmem:[#allocation3] sm:$0xf]
    %v421 = vmul.f32 %v419, %v420
    %v422 = vsel %vm49, %v421, 0.0
    %423 = vadd.xlane.f32.xlu0 %v422
    %v424 = vpop.xlane.xlu0 %423
    %v425 = vmul.f32 %v419, %v419
    %v426 = vsel %vm49, %v425, 0.0
    %427 = vadd.xlane.f32.xlu0 %v426
    %v428 = vpop.xlane.xlu0 %427
    %v429 = vmul.f32 %v420, %v420
    %v430 = vsel %vm49, %v429, 0.0
    %431 = vadd.xlane.f32.xlu0 %v430
    %v432 = vpop.xlane.xlu0 %431
    %v433 = vld [vmem:[#allocation5] sm:$0xf]
    %v434 = vld [vmem:[#allocation4] sm:$0xf]
    %v435 = vsub.f32 %v428, %v434
    %v436 = vmul.f32 %v435, 1.442695
    %v437 = vpow.pop %v436
    %v438 = vsub.f32 %v433, %v437
    %v439 = vmax.f32 %v438, 1e-30
    %v440 = vld [vmem:[#allocation7] sm:$0xf]
    %v441 = vld [vmem:[#allocation6] sm:$0xf]
    %v442 = vsub.f32 %v432, %v441
    %v443 = vmul.f32 %v442, 1.442695
    %v444 = vpow.pop %v443
    %v445 = vsub.f32 %v440, %v444
    %v446 = vmax.f32 %v445, 1e-30
    %v447 = vlog2.pop %v439
    %v448 = vmul.f32 %v447, 0.6931472
    %v449 = vadd.f32 %v434, %v448
    %v450 = vsub.f32 %v449, %v424
    %451 = vst.msk [vmem:[%s4] sm:$0xf] %vm387, %v450
    %v452 = vld [vmem:[#allocation6] sm:$0xf]
    %v453 = vlog2.pop %v446
    %v454 = vmul.f32 %v453, 0.6931472
    %v455 = vadd.f32 %v452, %v454
    %v456 = vsub.f32 %v455, %v424
    %s457 = scalar_lea.vmem %s4, 4
    %458 = vst.msk [vmem:[%s457] sm:$0xf] %vm387, %v456
  $region25: #{contrastive_clustering_loss.5} parent=0 // pred_fallthru
    _
  // Predicated region
  $region26: #{contrastive_clustering_loss.5} parent=0 // pred_check
    _
  $region27: #{contrastive_clustering_loss.5} parent=0 // pred_check_branch
    %460 = sbr.rel (0) target = $region29
  $region28: #{contrastive_clustering_loss.5} parent=0 // pred_region
    _
  $region29: #{contrastive_clustering_loss.5} parent=0 // pred_fallthru
    _
  // Predicated region
  $region30: #{contrastive_clustering_loss.5} parent=0 // pred_check
    _
  $region31: #{contrastive_clustering_loss.5} parent=0 // pred_check_branch
    %462 = sbr.rel (0) target = $region33
  $region32: #{contrastive_clustering_loss.5} parent=0 // pred_region
    _
  $region33: #{contrastive_clustering_loss.5} parent=0 // pred_fallthru
    _

</llo_original>
